<compile_context>
chip_gen: v7x
topology: tpu7x:2x2x1
jax: 0.10.0
libtpu: 0.0.40
codegen_flags: <defaults>
</compile_context>

<pallas_src>
import functools

import jax
import jax.numpy as jnp
from jax.experimental import pallas as pl
from jax.experimental.pallas import tpu as pltpu


def _mish(x):
    # Mish(x) = x * tanh(softplus(x));  tanh(log1p(e^x)) = ((1+e^x)^2-1)/((1+e^x)^2+1)
    # -> a single exp per element.  Large-x behavior handled by the where.
    t = jnp.exp(x)
    u = (1.0 + t) * (1.0 + t)
    if x.dtype == jnp.float32:
        inv = pl.reciprocal(u + 1.0, approx=True)
    else:
        inv = 1.0 / (u + 1.0)
    y = x * (u - 1.0) * inv
    return jnp.where(x > 20.0, x, y)


def _make_kernel(num_layers, k, tn, has_sc, elementwise_bf16):
    act_dtype = jnp.bfloat16 if elementwise_bf16 else jnp.float32

    def kernel(feat_ref, nbr_ref, *rest):
        out_ref = rest[-1]
        p = rest[:-1]

        ctr = feat_ref[0]                                   # (TN, Cin)
        ctr_bf = ctr.astype(jnp.bfloat16)
        nbr = nbr_ref[0]                                    # (TN*k, Cin) bf16, edge-flat

        # ---- layer 0 (algebraic fold; BN scale already folded into weights):
        #      [x_i, x_j-x_i] @ W0 == x_j @ W_diff + x_i @ (W_ctr - W_diff)
        w_diff, w_ctrm, b0 = p[0][...], p[1][...], p[2][...]
        hn = jnp.dot(nbr, w_diff, preferred_element_type=jnp.float32)      # (TN*k, C0)
        hc = jnp.dot(ctr_bf, w_ctrm, preferred_element_type=jnp.float32)   # (TN, C0)
        h = hn.reshape(tn, k, -1) + hc[:, None, :] + b0                    # (TN, k, C0) f32
        x = _mish(h.astype(act_dtype)).reshape(tn * k, -1)

        # ---- remaining 1x1-conv layers (bf16 operands, f32 accumulation,
        #      BN scale folded into w, shift added in f32 before the act cast)
        off = 3
        for _ in range(1, num_layers):
            w, b = p[off][...], p[off + 1][...]
            off += 2
            h = jnp.dot(x.astype(jnp.bfloat16), w,
                        preferred_element_type=jnp.float32) + b
            x = _mish(h.astype(act_dtype))

        cout = x.shape[-1]
        fts = x.astype(jnp.float32).reshape(tn, k, cout).sum(axis=1) * (1.0 / k)

        # ---- shortcut: folded 1x1 conv + BN shift, or identity (Cin == Cout)
        if has_sc:
            wsc, bsc = p[off][...], p[off + 1][...]
            sc = jnp.dot(ctr_bf, wsc, preferred_element_type=jnp.float32) + bsc
        else:
            sc = ctr.astype(jnp.float32)

        y = _mish(sc + fts)                                 # (TN, Cout) f32
        # Lane-dense store: emit (Cout, TN) so N sits on the lane axis in HBM.
        # TODO(synk): for Cout >= 128, emit channels-last (B, N, Cout) and chain
        # EdgeConv blocks channels-last to drop this per-tile XLU transpose.
        out_ref[0] = jnp.transpose(y, (1, 0)).astype(out_ref.dtype)

    return kernel


def _fold_bn(gamma, beta, mean, var, eps=1e-5):
    scale = gamma / jnp.sqrt(var + eps)
    shift = beta - mean * scale
    return scale.reshape(1, -1), shift.reshape(1, -1)


def knn_jax(points, k):
    # points: (B, C, N)
    inner = -2.0 * jnp.einsum("bcn,bcm->bnm", points, points)
    xx = jnp.sum(points ** 2, axis=1, keepdims=True)           # (B, 1, N)
    pdist = -xx - inner - jnp.transpose(xx, (0, 2, 1))          # (B, N, N)
    idx = jax.lax.top_k(pdist, k + 1)[1][:, :, 1:]              # drop self
    return idx                                                  # (B, N, k)


def _vmem_budget_bytes():
    cap = 64 * 1024 * 1024                      # conservative fallback (v7x-sized)
    try:
        info = pltpu.get_tpu_info()
        cap = int(getattr(info, "vmem_capacity_bytes", cap) or cap)
    except Exception:
        pass
    return (cap * 3) // 4                       # headroom for compiler scratch


def _pick_tile_n(n, k, cin, widths, cout, budget):
    """Largest point-tile whose working set fits the VMEM budget.
    TN must be a multiple of 128 (lane-dense output over N) or equal N."""
    wmax = max(widths)

    def tile_bytes(tn):
        e = tn * k
        return (2 * e * cin * 2           # neighbor stream, double-buffered bf16
                + 2 * tn * cin * 4        # feature block
                + 2 * cout * tn * 4       # output block (f32)
                + 3 * e * wmax * 4)       # live f32 activation chain

    cands = [t for t in (1024, 512, 256, 128) if t <= n and n % t == 0]
    for t in cands:
        if tile_bytes(t) <= budget:
            return t
    if cands:
        return cands[-1]    # smallest 128-multiple; TODO(synk): k-chunk instead
    return n                # small point clouds: single tile over N


def edge_conv_block(points, features, params, k, elementwise_bf16=False):
    """features: (B, Cin, N) f32.  Returns (B, Cout, N) f32 (PyTorch layout).

    Set elementwise_bf16=True on v6e/v7x to run the per-layer BN-shift + Mish
    chain in bf16; keep False on v5e (no bf16 VPU/EUP)."""
    B, Cin, N = features.shape
    conv_ws = params["conv_w"]          # [(2*Cin, C0), (C0, C1), ...]
    bn_s, bn_b = params["bn_scale"], params["bn_shift"]
    num_layers = len(conv_ws)
    widths = [int(w.shape[1]) for w in conv_ws]
    Cout = widths[-1]
    has_sc = Cin != Cout

    # ---- XLA glue: knn + gather.  The gather reads/writes bf16 and stays in
    #      the natural (B, N, k, Cin) order; the reshape below is metadata-only.
    idx = knn_jax(points, k)                                    # (B, N, k)
    f_nl = jnp.transpose(features, (0, 2, 1))                   # (B, N, Cin) f32
    f_bf = f_nl.astype(jnp.bfloat16)
    nbr = jax.vmap(lambda f, i: f[i])(f_bf, idx)                # (B, N, k, Cin) bf16
    nbr = nbr.reshape(B, N * k, Cin)                            # contiguous -> free
    feat_in = f_bf if has_sc else f_nl                          # f32 only for identity sc

    # ---- fold BN scale into weights; split W0 with the algebraic fold
    w0, s0 = conv_ws[0], bn_s[0]
    w_ctr, w_diff = w0[:Cin], w0[Cin:]
    flat_params = [(w_diff * s0).astype(jnp.bfloat16),
                   ((w_ctr - w_diff) * s0).astype(jnp.bfloat16),
                   bn_b[0]]
    for l in range(1, num_layers):
        flat_params += [(conv_ws[l] * bn_s[l]).astype(jnp.bfloat16), bn_b[l]]
    if has_sc:
        flat_params += [(params["sc_w"] * params["sc_scale"]).astype(jnp.bfloat16),
                        params["sc_shift"]]

    vmem_budget = _vmem_budget_bytes()
    TN = _pick_tile_n(N, k, Cin, widths, Cout, (vmem_budget * 7) // 10)
    assert N % TN == 0, (N, TN)           # never silently drop tail points
    grid = (B, N // TN)

    in_specs = [
        pl.BlockSpec((1, TN, Cin), lambda b, n: (b, n, 0)),
        pl.BlockSpec((1, TN * k, Cin), lambda b, n: (b, n, 0)),
    ]
    for prm in flat_params:                                      # all params are 2D
        in_specs.append(pl.BlockSpec(prm.shape, lambda b, n: (0, 0)))

    # ---- advisory cost estimate so XLA schedules knn/gather around the call
    flops = 2 * B * N * Cin * widths[0]                # layer-0 center term
    flops += 2 * B * N * k * Cin * widths[0]           # layer-0 neighbor term
    for l in range(1, num_layers):
        flops += 2 * B * N * k * widths[l - 1] * widths[l]
    if has_sc:
        flops += 2 * B * N * Cin * Cout
    trans = 2 * B * N * k * sum(widths) + 2 * B * N * Cout
    bytes_accessed = (nbr.size * 2 + feat_in.size * feat_in.dtype.itemsize
                      + B * Cout * N * 4
                      + sum(p_.size * p_.dtype.itemsize for p_ in flat_params))

    out = pl.pallas_call(
        _make_kernel(num_layers, k, TN, has_sc, elementwise_bf16),
        out_shape=jax.ShapeDtypeStruct((B, Cout, N), jnp.float32),
        grid=grid,
        in_specs=in_specs,
        out_specs=pl.BlockSpec((1, Cout, TN), lambda b, n: (b, 0, n)),
        compiler_params=pltpu.CompilerParams(
            dimension_semantics=("parallel", "parallel"),
            vmem_limit_bytes=int(vmem_budget)),
        cost_estimate=pl.CostEstimate(
            flops=int(flops), transcendentals=int(trans),
            bytes_accessed=int(bytes_accessed)),
    )(feat_in, nbr, *flat_params)
    return out                                                   # (B, Cout, N)


def edge_conv_block_ref(points, features, params, k):
    """Pure-JAX f32 reference (same folded-BN eval semantics) for verification."""
    B, Cin, N = features.shape
    Cout = params["conv_w"][-1].shape[1]
    idx = knn_jax(points, k)
    f_nl = jnp.transpose(features, (0, 2, 1))                    # (B, N, Cin)
    nbr = jax.vmap(lambda f, i: f[i])(f_nl, idx)                 # (B, N, k, Cin)
    ctr = jnp.broadcast_to(f_nl[:, :, None, :], nbr.shape)
    x = jnp.concatenate([ctr, nbr - ctr], axis=-1)               # (B, N, k, 2Cin)

    def mish(v):
        return v * jnp.tanh(jax.nn.softplus(v))

    for w, s, b in zip(params["conv_w"], params["bn_scale"], params["bn_shift"]):
        x = mish(jnp.einsum("bnkc,cd->bnkd", x, w) * s + b)
    fts = jnp.mean(x, axis=2)                                    # (B, N, Cout)
    if Cin != Cout:
        sc = (jnp.einsum("bnc,cd->bnd", f_nl, params["sc_w"])
              * params["sc_scale"] + params["sc_shift"])
    else:
        sc = f_nl
    y = mish(sc + fts)
    return jnp.transpose(y, (0, 2, 1))                           # (B, Cout, N)


def init_params(key, in_feat, out_feats):
    """Deterministic synthetic parameters (eval-mode BN folded to scale/shift)."""
    params = {"conv_w": [], "bn_scale": [], "bn_shift": []}
    c_in = 2 * in_feat
    for c_out in out_feats:
        key, kw, kg, kb, km, kv = jax.random.split(key, 6)
        w = 0.1 * jax.random.normal(kw, (c_out, c_in), jnp.float32)     # Conv2d weight
        gamma = 1.0 + 0.1 * jax.random.normal(kg, (c_out,), jnp.float32)
        beta = 0.1 * jax.random.normal(kb, (c_out,), jnp.float32)
        mean = 0.1 * jax.random.normal(km, (c_out,), jnp.float32)
        var = 1.0 + jnp.abs(0.1 * jax.random.normal(kv, (c_out,), jnp.float32))
        s, b = _fold_bn(gamma, beta, mean, var)
        params["conv_w"].append(jnp.transpose(w))                # (Cin_l, Cout_l)
        params["bn_scale"].append(s)
        params["bn_shift"].append(b)
        c_in = c_out

    c_last = out_feats[-1]
    if in_feat != c_last:                                        # else: identity shortcut
        key, kw, kg, kb, km, kv = jax.random.split(key, 6)
        w = 0.1 * jax.random.normal(kw, (c_last, in_feat), jnp.float32)  # Conv1d weight
        gamma = 1.0 + 0.1 * jax.random.normal(kg, (c_last,), jnp.float32)
        beta = 0.1 * jax.random.normal(kb, (c_last,), jnp.float32)
        mean = 0.1 * jax.random.normal(km, (c_last,), jnp.float32)
        var = 1.0 + jnp.abs(0.1 * jax.random.normal(kv, (c_last,), jnp.float32))
        s, b = _fold_bn(gamma, beta, mean, var)
        params["sc_w"] = jnp.transpose(w)                        # (Cin, Cout)
        params["sc_scale"] = s
        params["sc_shift"] = b
    return params


if __name__ == "__main__":
    B, C_PTS, N = 2, 3, 16
    K = 8                          # multiple of the 8-row sublane tile
    IN_FEAT = 8
    OUT_FEATS = (16, 16, 32)

    key = jax.random.PRNGKey(0)
    kp, kf, kparam = jax.random.split(key, 3)
    points = jax.random.normal(kp, (B, C_PTS, N), jnp.float32)
    features = jax.random.normal(kf, (B, IN_FEAT, N), jnp.float32)
    params = init_params(kparam, IN_FEAT, OUT_FEATS)

    fn = jax.jit(functools.partial(edge_conv_block, k=K))
    out = jax.block_until_ready(fn(points, features, params))
    assert out.shape == (B, OUT_FEATS[-1], N), out.shape

    # bf16-operand matmuls + approx-reciprocal Mish vs f32 reference: ~1e-2 level.
    ref = jax.jit(functools.partial(edge_conv_block_ref, k=K))(points, features, params)
    err = float(jnp.max(jnp.abs(out - ref)))
    assert err < 5e-2, f"max abs err {err}"
    print("KERNEL_OK")
</pallas_src>

<mosaic_0001>
module attributes {stable_mosaic.version = 11 : i64} {
  func.func @kernel(%arg0: i32, %arg1: i32, %arg2: memref<1x16x8xbf16, #tpu.memory_space<vmem>>, %arg3: memref<1x128x8xbf16, #tpu.memory_space<vmem>>, %arg4: memref<8x16xbf16, #tpu.memory_space<vmem>>, %arg5: memref<8x16xbf16, #tpu.memory_space<vmem>>, %arg6: memref<1x16xf32, #tpu.memory_space<vmem>>, %arg7: memref<16x16xbf16, #tpu.memory_space<vmem>>, %arg8: memref<1x16xf32, #tpu.memory_space<vmem>>, %arg9: memref<16x32xbf16, #tpu.memory_space<vmem>>, %arg10: memref<1x32xf32, #tpu.memory_space<vmem>>, %arg11: memref<8x32xbf16, #tpu.memory_space<vmem>>, %arg12: memref<1x32xf32, #tpu.memory_space<vmem>>, %arg13: memref<1x32x16xf32, #tpu.memory_space<vmem>>) attributes {dimension_semantics = [#tpu.dimension_semantics<parallel>, #tpu.dimension_semantics<parallel>], iteration_bounds = array<i64: 2, 1>, scalar_prefetch = 0 : i64, scratch_operands = 0 : i64, tpu.core_type = #tpu.core_type<tc>, window_params = [{transform_indices = @transform_0, window_bounds = array<i64: 1, 16, 8>}, {transform_indices = @transform_1, window_bounds = array<i64: 1, 128, 8>}, {pipeline_mode = #tpu.pipeline_mode<synchronous>, transform_indices = @transform_2, window_bounds = array<i64: 8, 16>}, {pipeline_mode = #tpu.pipeline_mode<synchronous>, transform_indices = @transform_3, window_bounds = array<i64: 8, 16>}, {pipeline_mode = #tpu.pipeline_mode<synchronous>, transform_indices = @transform_4, window_bounds = array<i64: 1, 16>}, {pipeline_mode = #tpu.pipeline_mode<synchronous>, transform_indices = @transform_5, window_bounds = array<i64: 16, 16>}, {pipeline_mode = #tpu.pipeline_mode<synchronous>, transform_indices = @transform_6, window_bounds = array<i64: 1, 16>}, {pipeline_mode = #tpu.pipeline_mode<synchronous>, transform_indices = @transform_7, window_bounds = array<i64: 16, 32>}, {pipeline_mode = #tpu.pipeline_mode<synchronous>, transform_indices = @transform_8, window_bounds = array<i64: 1, 32>}, {pipeline_mode = #tpu.pipeline_mode<synchronous>, transform_indices = @transform_9, window_bounds = array<i64: 8, 32>}, {pipeline_mode = #tpu.pipeline_mode<synchronous>, transform_indices = @transform_10, window_bounds = array<i64: 1, 32>}, {transform_indices = @transform_11, window_bounds = array<i64: 1, 32, 16>}]} {
    %c0 = arith.constant 0 : index
    %c0_0 = arith.constant 0 : index
    %c0_1 = arith.constant 0 : index
    %0 = vector.load %arg2[%c0, %c0_0, %c0_1] : memref<1x16x8xbf16, #tpu.memory_space<vmem>>, vector<1x16x8xbf16>
    %1 = vector.shape_cast %0 : vector<1x16x8xbf16> to vector<16x8xbf16>
    %c0_2 = arith.constant 0 : index
    %c0_3 = arith.constant 0 : index
    %c0_4 = arith.constant 0 : index
    %2 = vector.load %arg3[%c0_2, %c0_3, %c0_4] : memref<1x128x8xbf16, #tpu.memory_space<vmem>>, vector<1x128x8xbf16>
    %3 = vector.shape_cast %2 : vector<1x128x8xbf16> to vector<128x8xbf16>
    %c0_5 = arith.constant 0 : index
    %c0_6 = arith.constant 0 : index
    %4 = vector.load %arg4[%c0_5, %c0_6] : memref<8x16xbf16, #tpu.memory_space<vmem>>, vector<8x16xbf16>
    %c0_7 = arith.constant 0 : index
    %c0_8 = arith.constant 0 : index
    %5 = vector.load %arg5[%c0_7, %c0_8] : memref<8x16xbf16, #tpu.memory_space<vmem>>, vector<8x16xbf16>
    %c0_9 = arith.constant 0 : index
    %c0_10 = arith.constant 0 : index
    %6 = vector.load %arg6[%c0_9, %c0_10] : memref<1x16xf32, #tpu.memory_space<vmem>>, vector<1x16xf32>
    %cst = arith.constant dense<0.000000e+00> : vector<128x16xf32>
    %7 = tpu.matmul %3, %4, %cst {dimension_numbers = #tpu.dot_dimension_numbers<[1], [0], [0], [1], [0, 0, 1, 1], [], []>} : vector<128x8xbf16>, vector<8x16xbf16>, vector<128x16xf32> -> vector<128x16xf32>
    %cst_11 = arith.constant dense<0.000000e+00> : vector<16x16xf32>
    %8 = tpu.matmul %1, %5, %cst_11 {dimension_numbers = #tpu.dot_dimension_numbers<[1], [0], [0], [1], [0, 0, 1, 1], [], []>} : vector<16x8xbf16>, vector<8x16xbf16>, vector<16x16xf32> -> vector<16x16xf32>
    %9 = vector.shape_cast %7 : vector<128x16xf32> to vector<16x8x16xf32>
    %10 = vector.shape_cast %8 : vector<16x16xf32> to vector<16x1x16xf32>
    %11 = vector.broadcast %10 : vector<16x1x16xf32> to vector<16x8x16xf32>
    %12 = arith.addf %9, %11 : vector<16x8x16xf32>
    %13 = vector.shape_cast %6 : vector<1x16xf32> to vector<1x1x16xf32>
    %14 = vector.broadcast %13 : vector<1x1x16xf32> to vector<16x8x16xf32>
    %15 = arith.addf %12, %14 : vector<16x8x16xf32>
    %16 = math.exp %15 : vector<16x8x16xf32>
    %cst_12 = arith.constant 1.000000e+00 : f32
    %17 = vector.broadcast %cst_12 : f32 to vector<16x8x16xf32>
    %18 = arith.addf %17, %16 : vector<16x8x16xf32>
    %cst_13 = arith.constant 1.000000e+00 : f32
    %19 = vector.broadcast %cst_13 : f32 to vector<16x8x16xf32>
    %20 = arith.addf %19, %16 : vector<16x8x16xf32>
    %21 = arith.mulf %18, %20 : vector<16x8x16xf32>
    %cst_14 = arith.constant 1.000000e+00 : f32
    %22 = vector.broadcast %cst_14 : f32 to vector<16x8x16xf32>
    %23 = arith.addf %21, %22 : vector<16x8x16xf32>
    %24 = tpu.reciprocal %23 {approx = true} : vector<16x8x16xf32> -> vector<16x8x16xf32>
    %cst_15 = arith.constant 1.000000e+00 : f32
    %25 = vector.broadcast %cst_15 : f32 to vector<16x8x16xf32>
    %26 = arith.subf %21, %25 : vector<16x8x16xf32>
    %27 = arith.mulf %15, %26 : vector<16x8x16xf32>
    %28 = arith.mulf %27, %24 : vector<16x8x16xf32>
    %cst_16 = arith.constant 2.000000e+01 : f32
    %29 = vector.broadcast %cst_16 : f32 to vector<16x8x16xf32>
    %30 = arith.cmpf ogt, %15, %29 : vector<16x8x16xf32>
    %31 = arith.select %30, %15, %28 : vector<16x8x16xi1>, vector<16x8x16xf32>
    %32 = vector.shape_cast %31 : vector<16x8x16xf32> to vector<128x16xf32>
    %c0_17 = arith.constant 0 : index
    %c0_18 = arith.constant 0 : index
    %33 = vector.load %arg7[%c0_17, %c0_18] : memref<16x16xbf16, #tpu.memory_space<vmem>>, vector<16x16xbf16>
    %c0_19 = arith.constant 0 : index
    %c0_20 = arith.constant 0 : index
    %34 = vector.load %arg8[%c0_19, %c0_20] : memref<1x16xf32, #tpu.memory_space<vmem>>, vector<1x16xf32>
    %35 = arith.truncf %32 : vector<128x16xf32> to vector<128x16xbf16>
    %cst_21 = arith.constant dense<0.000000e+00> : vector<128x16xf32>
    %36 = tpu.matmul %35, %33, %cst_21 {dimension_numbers = #tpu.dot_dimension_numbers<[1], [0], [0], [1], [0, 0, 1, 1], [], []>} : vector<128x16xbf16>, vector<16x16xbf16>, vector<128x16xf32> -> vector<128x16xf32>
    %37 = vector.broadcast %34 : vector<1x16xf32> to vector<128x16xf32>
    %38 = arith.addf %36, %37 : vector<128x16xf32>
    %39 = math.exp %38 : vector<128x16xf32>
    %cst_22 = arith.constant 1.000000e+00 : f32
    %40 = vector.broadcast %cst_22 : f32 to vector<128x16xf32>
    %41 = arith.addf %40, %39 : vector<128x16xf32>
    %cst_23 = arith.constant 1.000000e+00 : f32
    %42 = vector.broadcast %cst_23 : f32 to vector<128x16xf32>
    %43 = arith.addf %42, %39 : vector<128x16xf32>
    %44 = arith.mulf %41, %43 : vector<128x16xf32>
    %cst_24 = arith.constant 1.000000e+00 : f32
    %45 = vector.broadcast %cst_24 : f32 to vector<128x16xf32>
    %46 = arith.addf %44, %45 : vector<128x16xf32>
    %47 = tpu.reciprocal %46 {approx = true} : vector<128x16xf32> -> vector<128x16xf32>
    %cst_25 = arith.constant 1.000000e+00 : f32
    %48 = vector.broadcast %cst_25 : f32 to vector<128x16xf32>
    %49 = arith.subf %44, %48 : vector<128x16xf32>
    %50 = arith.mulf %38, %49 : vector<128x16xf32>
    %51 = arith.mulf %50, %47 : vector<128x16xf32>
    %cst_26 = arith.constant 2.000000e+01 : f32
    %52 = vector.broadcast %cst_26 : f32 to vector<128x16xf32>
    %53 = arith.cmpf ogt, %38, %52 : vector<128x16xf32>
    %54 = arith.select %53, %38, %51 : vector<128x16xi1>, vector<128x16xf32>
    %c0_27 = arith.constant 0 : index
    %c0_28 = arith.constant 0 : index
    %55 = vector.load %arg9[%c0_27, %c0_28] : memref<16x32xbf16, #tpu.memory_space<vmem>>, vector<16x32xbf16>
    %c0_29 = arith.constant 0 : index
    %c0_30 = arith.constant 0 : index
    %56 = vector.load %arg10[%c0_29, %c0_30] : memref<1x32xf32, #tpu.memory_space<vmem>>, vector<1x32xf32>
    %57 = arith.truncf %54 : vector<128x16xf32> to vector<128x16xbf16>
    %cst_31 = arith.constant dense<0.000000e+00> : vector<128x32xf32>
    %58 = tpu.matmul %57, %55, %cst_31 {dimension_numbers = #tpu.dot_dimension_numbers<[1], [0], [0], [1], [0, 0, 1, 1], [], []>} : vector<128x16xbf16>, vector<16x32xbf16>, vector<128x32xf32> -> vector<128x32xf32>
    %59 = vector.broadcast %56 : vector<1x32xf32> to vector<128x32xf32>
    %60 = arith.addf %58, %59 : vector<128x32xf32>
    %61 = math.exp %60 : vector<128x32xf32>
    %cst_32 = arith.constant 1.000000e+00 : f32
    %62 = vector.broadcast %cst_32 : f32 to vector<128x32xf32>
    %63 = arith.addf %62, %61 : vector<128x32xf32>
    %cst_33 = arith.constant 1.000000e+00 : f32
    %64 = vector.broadcast %cst_33 : f32 to vector<128x32xf32>
    %65 = arith.addf %64, %61 : vector<128x32xf32>
    %66 = arith.mulf %63, %65 : vector<128x32xf32>
    %cst_34 = arith.constant 1.000000e+00 : f32
    %67 = vector.broadcast %cst_34 : f32 to vector<128x32xf32>
    %68 = arith.addf %66, %67 : vector<128x32xf32>
    %69 = tpu.reciprocal %68 {approx = true} : vector<128x32xf32> -> vector<128x32xf32>
    %cst_35 = arith.constant 1.000000e+00 : f32
    %70 = vector.broadcast %cst_35 : f32 to vector<128x32xf32>
    %71 = arith.subf %66, %70 : vector<128x32xf32>
    %72 = arith.mulf %60, %71 : vector<128x32xf32>
    %73 = arith.mulf %72, %69 : vector<128x32xf32>
    %cst_36 = arith.constant 2.000000e+01 : f32
    %74 = vector.broadcast %cst_36 : f32 to vector<128x32xf32>
    %75 = arith.cmpf ogt, %60, %74 : vector<128x32xf32>
    %76 = arith.select %75, %60, %73 : vector<128x32xi1>, vector<128x32xf32>
    %77 = vector.shape_cast %76 : vector<128x32xf32> to vector<16x8x32xf32>
    %cst_37 = arith.constant dense<0.000000e+00> : vector<16x32xf32>
    %78 = vector.multi_reduction <add>, %77, %cst_37 [1] : vector<16x8x32xf32> to vector<16x32xf32>
    %cst_38 = arith.constant 1.250000e-01 : f32
    %79 = vector.broadcast %cst_38 : f32 to vector<16x32xf32>
    %80 = arith.mulf %78, %79 : vector<16x32xf32>
    %c0_39 = arith.constant 0 : index
    %c0_40 = arith.constant 0 : index
    %81 = vector.load %arg11[%c0_39, %c0_40] : memref<8x32xbf16, #tpu.memory_space<vmem>>, vector<8x32xbf16>
    %c0_41 = arith.constant 0 : index
    %c0_42 = arith.constant 0 : index
    %82 = vector.load %arg12[%c0_41, %c0_42] : memref<1x32xf32, #tpu.memory_space<vmem>>, vector<1x32xf32>
    %cst_43 = arith.constant dense<0.000000e+00> : vector<16x32xf32>
    %83 = tpu.matmul %1, %81, %cst_43 {dimension_numbers = #tpu.dot_dimension_numbers<[1], [0], [0], [1], [0, 0, 1, 1], [], []>} : vector<16x8xbf16>, vector<8x32xbf16>, vector<16x32xf32> -> vector<16x32xf32>
    %84 = vector.broadcast %82 : vector<1x32xf32> to vector<16x32xf32>
    %85 = arith.addf %83, %84 : vector<16x32xf32>
    %86 = arith.addf %85, %80 : vector<16x32xf32>
    %87 = math.exp %86 : vector<16x32xf32>
    %cst_44 = arith.constant 1.000000e+00 : f32
    %88 = vector.broadcast %cst_44 : f32 to vector<16x32xf32>
    %89 = arith.addf %88, %87 : vector<16x32xf32>
    %cst_45 = arith.constant 1.000000e+00 : f32
    %90 = vector.broadcast %cst_45 : f32 to vector<16x32xf32>
    %91 = arith.addf %90, %87 : vector<16x32xf32>
    %92 = arith.mulf %89, %91 : vector<16x32xf32>
    %cst_46 = arith.constant 1.000000e+00 : f32
    %93 = vector.broadcast %cst_46 : f32 to vector<16x32xf32>
    %94 = arith.addf %92, %93 : vector<16x32xf32>
    %95 = tpu.reciprocal %94 {approx = true} : vector<16x32xf32> -> vector<16x32xf32>
    %cst_47 = arith.constant 1.000000e+00 : f32
    %96 = vector.broadcast %cst_47 : f32 to vector<16x32xf32>
    %97 = arith.subf %92, %96 : vector<16x32xf32>
    %98 = arith.mulf %86, %97 : vector<16x32xf32>
    %99 = arith.mulf %98, %95 : vector<16x32xf32>
    %cst_48 = arith.constant 2.000000e+01 : f32
    %100 = vector.broadcast %cst_48 : f32 to vector<16x32xf32>
    %101 = arith.cmpf ogt, %86, %100 : vector<16x32xf32>
    %102 = arith.select %101, %86, %99 : vector<16x32xi1>, vector<16x32xf32>
    %103 = tpu.transpose %102, [1, 0] : vector<16x32xf32> -> vector<32x16xf32>
    %c0_49 = arith.constant 0 : index
    %c0_50 = arith.constant 0 : index
    %c0_51 = arith.constant 0 : index
    %104 = vector.load %arg13[%c0_49, %c0_50, %c0_51] : memref<1x32x16xf32, #tpu.memory_space<vmem>>, vector<1x32x16xf32>
    %105 = vector.shape_cast %104 : vector<1x32x16xf32> to vector<32x16xf32>
    %106 = vector.shape_cast %103 : vector<32x16xf32> to vector<1x32x16xf32>
    tpu.vector_store %arg13[%c0_49, %c0_50, %c0_51], %106 {strides = array<i32>} : memref<1x32x16xf32, #tpu.memory_space<vmem>>, vector<1x32x16xf32>,
    return
  }
  func.func @transform_0(%arg0: i32, %arg1: i32) -> (i32, i32, i32) {
    %c0_i32 = arith.constant 0 : i32
    %c0_i32_0 = arith.constant 0 : i32
    return %arg0, %arg1, %c0_i32 : i32, i32, i32
  }
  func.func @transform_1(%arg0: i32, %arg1: i32) -> (i32, i32, i32) {
    %c0_i32 = arith.constant 0 : i32
    %c0_i32_0 = arith.constant 0 : i32
    return %arg0, %arg1, %c0_i32 : i32, i32, i32
  }
  func.func @transform_2(%arg0: i32, %arg1: i32) -> (i32, i32) {
    %c0_i32 = arith.constant 0 : i32
    %c0_i32_0 = arith.constant 0 : i32
    %c0_i32_1 = arith.constant 0 : i32
    return %c0_i32, %c0_i32_0 : i32, i32
  }
  func.func @transform_3(%arg0: i32, %arg1: i32) -> (i32, i32) {
    %c0_i32 = arith.constant 0 : i32
    %c0_i32_0 = arith.constant 0 : i32
    %c0_i32_1 = arith.constant 0 : i32
    return %c0_i32, %c0_i32_0 : i32, i32
  }
  func.func @transform_4(%arg0: i32, %arg1: i32) -> (i32, i32) {
    %c0_i32 = arith.constant 0 : i32
    %c0_i32_0 = arith.constant 0 : i32
    %c0_i32_1 = arith.constant 0 : i32
    return %c0_i32, %c0_i32_0 : i32, i32
  }
  func.func @transform_5(%arg0: i32, %arg1: i32) -> (i32, i32) {
    %c0_i32 = arith.constant 0 : i32
    %c0_i32_0 = arith.constant 0 : i32
    %c0_i32_1 = arith.constant 0 : i32
    return %c0_i32, %c0_i32_0 : i32, i32
  }
  func.func @transform_6(%arg0: i32, %arg1: i32) -> (i32, i32) {
    %c0_i32 = arith.constant 0 : i32
    %c0_i32_0 = arith.constant 0 : i32
    %c0_i32_1 = arith.constant 0 : i32
    return %c0_i32, %c0_i32_0 : i32, i32
  }
  func.func @transform_7(%arg0: i32, %arg1: i32) -> (i32, i32) {
    %c0_i32 = arith.constant 0 : i32
    %c0_i32_0 = arith.constant 0 : i32
    %c0_i32_1 = arith.constant 0 : i32
    return %c0_i32, %c0_i32_0 : i32, i32
  }
  func.func @transform_8(%arg0: i32, %arg1: i32) -> (i32, i32) {
    %c0_i32 = arith.constant 0 : i32
    %c0_i32_0 = arith.constant 0 : i32
    %c0_i32_1 = arith.constant 0 : i32
    return %c0_i32, %c0_i32_0 : i32, i32
  }
  func.func @transform_9(%arg0: i32, %arg1: i32) -> (i32, i32) {
    %c0_i32 = arith.constant 0 : i32
    %c0_i32_0 = arith.constant 0 : i32
    %c0_i32_1 = arith.constant 0 : i32
    return %c0_i32, %c0_i32_0 : i32, i32
  }
  func.func @transform_10(%arg0: i32, %arg1: i32) -> (i32, i32) {
    %c0_i32 = arith.constant 0 : i32
    %c0_i32_0 = arith.constant 0 : i32
    %c0_i32_1 = arith.constant 0 : i32
    return %c0_i32, %c0_i32_0 : i32, i32
  }
  func.func @transform_11(%arg0: i32, %arg1: i32) -> (i32, i32, i32) {
    %c0_i32 = arith.constant 0 : i32
    %c0_i32_0 = arith.constant 0 : i32
    return %arg0, %c0_i32, %arg1 : i32, i32, i32
  }
}

</mosaic_0001>

<llo_original>
// kernel: neg.5
$region0: #{neg.5}
  #allocation0 [shape = 's32[1]{0}', space=sflag, size = 0x4, scoped, tag = 'scoped memory for neg.5']
  %s0 = inlined_call_operand.vmem [shape: f32[2,16], index: 0, kind: input, shape index: {}]
  %s1 = inlined_call_operand.vmem [shape: f32[2,16], index: 1, kind: output, shape index: {}]
  %v2 = vld [vmem:[%s0] sm:$0x3]
  %3 = xla_tuple %v2
  %4 = xla_tuple %3
  %v5 = vxor.u32 %v2, 2147483648
  %6 = xla_tuple %v5
  %7 = vst [vmem:[%s1] sm:$0x3] %v5

// kernel: edge_conv_block.1
$region0: #{edge_conv_block.1}
  #allocation0 [shape = 'u32[]', space=smem, size = 0x4, offset = 0x4, fixed_abs, tag = 'smem constant byte address 0x4 - core index']
  #allocation1 [shape = 'u32[144,128]{1,0:T(1,128)}', space=vmem, size = 0x12000, scoped, tag = 'internal scratch']
  %s0 = inlined_call_operand.vmem [shape: bf16[2,16,8], index: 0, kind: input, shape index: {}]
  %s1 = inlined_call_operand.vmem [shape: bf16[2,128,8], index: 1, kind: input, shape index: {}]
  %s2 = inlined_call_operand.vmem [shape: bf16[8,16], index: 2, kind: input, shape index: {}]
  %s3 = inlined_call_operand.vmem [shape: bf16[8,16], index: 3, kind: input, shape index: {}]
  %s4 = inlined_call_operand.vmem [shape: f32[1,16], index: 4, kind: input, shape index: {}]
  %s5 = inlined_call_operand.vmem [shape: bf16[16,16], index: 5, kind: input, shape index: {}]
  %s6 = inlined_call_operand.vmem [shape: f32[1,16], index: 6, kind: input, shape index: {}]
  %s7 = inlined_call_operand.vmem [shape: bf16[16,32], index: 7, kind: input, shape index: {}]
  %s8 = inlined_call_operand.vmem [shape: f32[1,32], index: 8, kind: input, shape index: {}]
  %s9 = inlined_call_operand.vmem [shape: bf16[8,32], index: 9, kind: input, shape index: {}]
  %s10 = inlined_call_operand.vmem [shape: f32[1,32], index: 10, kind: input, shape index: {}]
  %s11 = inlined_call_operand.vmem [shape: f32[2,32,16], index: 11, kind: output, shape index: {}]
  %s12 = sld [smem:[#allocation0]]
  $region77: #{edge_conv_block.1} parent=0
    _
  %s14 = ssub.s32 1, %s12
  %s15 = scalar_select 0, %s14, %s12
  loop: start=0, step=1, limit=4
  $region2: #{edge_conv_block.1} parent=0 // loop_pre_header
    _
  $region3: #{edge_conv_block.1} parent=0 // loop_header
    %s17 = sphi 0, %s21
    %p18 = scmp.ge.s32.totalorder %s17, 4
    %s24 = sphi 0, %s36
    %s25 = sphi 0, %s32
    %s26 = sphi 0, %s24
    %s27 = sphi 0, %s25
    %s28 = sphi 0, %s26
    %s29 = sphi 0, %s27
    %s41 = sphi 0, %s43
    %s44 = sphi 0, %s41
    %s45 = sphi 0, %s44
    %s61 = sphi 0, %s45
    %s69 = sphi 0, %s71
    %s72 = sphi 0, %s69
    %s73 = sphi 0, %s72
    %s89 = sphi 0, %s73
    %s93 = sphi 0, %s93
    %s95 = sphi 0, %s93
    %s96 = sphi 0, %s95
    %s110 = sphi 0, %s96
    %s114 = sphi 0, %s114
    %s116 = sphi 0, %s114
    %s117 = sphi 0, %s116
    %s131 = sphi 0, %s117
    %s135 = sphi 0, %s135
    %s137 = sphi 0, %s135
    %s138 = sphi 0, %s137
    %s152 = sphi 0, %s138
    %s156 = sphi 0, %s156
    %s158 = sphi 0, %s156
    %s159 = sphi 0, %s158
    %s173 = sphi 0, %s159
    %s177 = sphi 0, %s177
    %s179 = sphi 0, %s177
    %s180 = sphi 0, %s179
    %s194 = sphi 0, %s180
    %s198 = sphi 0, %s198
    %s200 = sphi 0, %s198
    %s201 = sphi 0, %s200
    %s215 = sphi 0, %s201
    %s219 = sphi 0, %s219
    %s221 = sphi 0, %s219
    %s222 = sphi 0, %s221
    %s236 = sphi 0, %s222
    %s240 = sphi 0, %s240
    %s242 = sphi 0, %s240
    %s243 = sphi 0, %s242
    %s257 = sphi 0, %s243
    %s261 = sphi 0, %s261
    %s263 = sphi 0, %s261
    %s264 = sphi 0, %s263
    %s278 = sphi 0, %s264
    %s286 = sphi 0, %s288
    %s289 = sphi 0, %s286
    %s290 = sphi 0, %s289
    %s306 = sphi 0, %s290
  $region4: #{edge_conv_block.1} parent=0 // loop_header_branch
    %20 = sbr.rel (%p18) target = $region8
  $region5: #{edge_conv_block.1} parent=0 // loop_body
    %s22 = ssub.s32 %s17, 1
    %s23 = ssub.s32 %s17, 2
    %s30 = sadd.s32 1, %s25
    %p31 = scmp.ge.s32.totalorder %s30, 1
    %s32 = scalar_select %p31, 0, %s30
    %s33 = sadd.s32 1, %s24
    %s34 = scalar_select %p31, %s33, %s24
    %p35 = scmp.ge.s32.totalorder %s34, 2
    %s36 = scalar_select %p35, 0, %s34
    %s37 = ssub.s32 %s24, %s36
    %s38 = ssub.s32 %s25, %s32
    %s39 = sor.u32 %s37, %s38
    %p40 = scmp.eq.s32.totalorder %s39, 0
    %s42 = sadd.s32 %s41, 1
    %s43 = scalar_select %p40, %s41, %s42
    %p46 = pneg %p40
    %p47 = scmp.eq.s32.totalorder %s17, 1
    %p48 = por %p46, %p47
    %p49 = scmp.ne.s32.totalorder %s41, %s44
    %p50 = scmp.eq.s32.totalorder %s17, 0
    %p51 = por %p49, %p50
    %p52 = scmp.ne.s32.totalorder %s41, %s44
    %p53 = scmp.eq.s32.totalorder %s22, 1
    %p54 = por %p52, %p53
    %p55 = scmp.ne.s32.totalorder %s44, %s45
    %p56 = scmp.eq.s32.totalorder %s22, 0
    %p57 = por %p55, %p56
    %p58 = scmp.ne.s32.totalorder %s44, %s45
    %p59 = scmp.eq.s32.totalorder %s23, 1
    %p60 = por %p58, %p59
    %p62 = scmp.ne.s32.totalorder %s45, %s61
    %p63 = scmp.eq.s32.totalorder %s23, 0
    %p64 = por %p62, %p63
    %s65 = ssub.s32 %s24, %s36
    %s66 = ssub.s32 %s25, %s32
    %s67 = sor.u32 %s65, %s66
    %p68 = scmp.eq.s32.totalorder %s67, 0
    %s70 = sadd.s32 %s69, 1
    %s71 = scalar_select %p68, %s69, %s70
    %p74 = pneg %p68
    %p75 = scmp.eq.s32.totalorder %s17, 1
    %p76 = por %p74, %p75
    %p77 = scmp.ne.s32.totalorder %s69, %s72
    %p78 = scmp.eq.s32.totalorder %s17, 0
    %p79 = por %p77, %p78
    %p80 = scmp.ne.s32.totalorder %s69, %s72
    %p81 = scmp.eq.s32.totalorder %s22, 1
    %p82 = por %p80, %p81
    %p83 = scmp.ne.s32.totalorder %s72, %s73
    %p84 = scmp.eq.s32.totalorder %s22, 0
    %p85 = por %p83, %p84
    %p86 = scmp.ne.s32.totalorder %s72, %s73
    %p87 = scmp.eq.s32.totalorder %s23, 1
    %p88 = por %p86, %p87
    %p90 = scmp.ne.s32.totalorder %s73, %s89
    %p91 = scmp.eq.s32.totalorder %s23, 0
    %p92 = por %p90, %p91
    %s94 = sadd.s32 %s93, 1
    %p97 = scmp.eq.s32.totalorder %s17, 1
    %p98 = scmp.ne.s32.totalorder %s93, %s95
    %p99 = scmp.eq.s32.totalorder %s17, 0
    %p100 = por %p98, %p99
    %p101 = scmp.ne.s32.totalorder %s93, %s95
    %p102 = scmp.eq.s32.totalorder %s22, 1
    %p103 = por %p101, %p102
    %p104 = scmp.ne.s32.totalorder %s95, %s96
    %p105 = scmp.eq.s32.totalorder %s22, 0
    %p106 = por %p104, %p105
    %p107 = scmp.ne.s32.totalorder %s95, %s96
    %p108 = scmp.eq.s32.totalorder %s23, 1
    %p109 = por %p107, %p108
    %p111 = scmp.ne.s32.totalorder %s96, %s110
    %p112 = scmp.eq.s32.totalorder %s23, 0
    %p113 = por %p111, %p112
    %s115 = sadd.s32 %s114, 1
    %p118 = scmp.eq.s32.totalorder %s17, 1
    %p119 = scmp.ne.s32.totalorder %s114, %s116
    %p120 = scmp.eq.s32.totalorder %s17, 0
    %p121 = por %p119, %p120
    %p122 = scmp.ne.s32.totalorder %s114, %s116
    %p123 = scmp.eq.s32.totalorder %s22, 1
    %p124 = por %p122, %p123
    %p125 = scmp.ne.s32.totalorder %s116, %s117
    %p126 = scmp.eq.s32.totalorder %s22, 0
    %p127 = por %p125, %p126
    %p128 = scmp.ne.s32.totalorder %s116, %s117
    %p129 = scmp.eq.s32.totalorder %s23, 1
    %p130 = por %p128, %p129
    %p132 = scmp.ne.s32.totalorder %s117, %s131
    %p133 = scmp.eq.s32.totalorder %s23, 0
    %p134 = por %p132, %p133
    %s136 = sadd.s32 %s135, 1
    %p139 = scmp.eq.s32.totalorder %s17, 1
    %p140 = scmp.ne.s32.totalorder %s135, %s137
    %p141 = scmp.eq.s32.totalorder %s17, 0
    %p142 = por %p140, %p141
    %p143 = scmp.ne.s32.totalorder %s135, %s137
    %p144 = scmp.eq.s32.totalorder %s22, 1
    %p145 = por %p143, %p144
    %p146 = scmp.ne.s32.totalorder %s137, %s138
    %p147 = scmp.eq.s32.totalorder %s22, 0
    %p148 = por %p146, %p147
    %p149 = scmp.ne.s32.totalorder %s137, %s138
    %p150 = scmp.eq.s32.totalorder %s23, 1
    %p151 = por %p149, %p150
    %p153 = scmp.ne.s32.totalorder %s138, %s152
    %p154 = scmp.eq.s32.totalorder %s23, 0
    %p155 = por %p153, %p154
    %s157 = sadd.s32 %s156, 1
    %p160 = scmp.eq.s32.totalorder %s17, 1
    %p161 = scmp.ne.s32.totalorder %s156, %s158
    %p162 = scmp.eq.s32.totalorder %s17, 0
    %p163 = por %p161, %p162
    %p164 = scmp.ne.s32.totalorder %s156, %s158
    %p165 = scmp.eq.s32.totalorder %s22, 1
    %p166 = por %p164, %p165
    %p167 = scmp.ne.s32.totalorder %s158, %s159
    %p168 = scmp.eq.s32.totalorder %s22, 0
    %p169 = por %p167, %p168
    %p170 = scmp.ne.s32.totalorder %s158, %s159
    %p171 = scmp.eq.s32.totalorder %s23, 1
    %p172 = por %p170, %p171
    %p174 = scmp.ne.s32.totalorder %s159, %s173
    %p175 = scmp.eq.s32.totalorder %s23, 0
    %p176 = por %p174, %p175
    %s178 = sadd.s32 %s177, 1
    %p181 = scmp.eq.s32.totalorder %s17, 1
    %p182 = scmp.ne.s32.totalorder %s177, %s179
    %p183 = scmp.eq.s32.totalorder %s17, 0
    %p184 = por %p182, %p183
    %p185 = scmp.ne.s32.totalorder %s177, %s179
    %p186 = scmp.eq.s32.totalorder %s22, 1
    %p187 = por %p185, %p186
    %p188 = scmp.ne.s32.totalorder %s179, %s180
    %p189 = scmp.eq.s32.totalorder %s22, 0
    %p190 = por %p188, %p189
    %p191 = scmp.ne.s32.totalorder %s179, %s180
    %p192 = scmp.eq.s32.totalorder %s23, 1
    %p193 = por %p191, %p192
    %p195 = scmp.ne.s32.totalorder %s180, %s194
    %p196 = scmp.eq.s32.totalorder %s23, 0
    %p197 = por %p195, %p196
    %s199 = sadd.s32 %s198, 1
    %p202 = scmp.eq.s32.totalorder %s17, 1
    %p203 = scmp.ne.s32.totalorder %s198, %s200
    %p204 = scmp.eq.s32.totalorder %s17, 0
    %p205 = por %p203, %p204
    %p206 = scmp.ne.s32.totalorder %s198, %s200
    %p207 = scmp.eq.s32.totalorder %s22, 1
    %p208 = por %p206, %p207
    %p209 = scmp.ne.s32.totalorder %s200, %s201
    %p210 = scmp.eq.s32.totalorder %s22, 0
    %p211 = por %p209, %p210
    %p212 = scmp.ne.s32.totalorder %s200, %s201
    %p213 = scmp.eq.s32.totalorder %s23, 1
    %p214 = por %p212, %p213
    %p216 = scmp.ne.s32.totalorder %s201, %s215
    %p217 = scmp.eq.s32.totalorder %s23, 0
    %p218 = por %p216, %p217
    %s220 = sadd.s32 %s219, 1
    %p223 = scmp.eq.s32.totalorder %s17, 1
    %p224 = scmp.ne.s32.totalorder %s219, %s221
    %p225 = scmp.eq.s32.totalorder %s17, 0
    %p226 = por %p224, %p225
    %p227 = scmp.ne.s32.totalorder %s219, %s221
    %p228 = scmp.eq.s32.totalorder %s22, 1
    %p229 = por %p227, %p228
    %p230 = scmp.ne.s32.totalorder %s221, %s222
    %p231 = scmp.eq.s32.totalorder %s22, 0
    %p232 = por %p230, %p231
    %p233 = scmp.ne.s32.totalorder %s221, %s222
    %p234 = scmp.eq.s32.totalorder %s23, 1
    %p235 = por %p233, %p234
    %p237 = scmp.ne.s32.totalorder %s222, %s236
    %p238 = scmp.eq.s32.totalorder %s23, 0
    %p239 = por %p237, %p238
    %s241 = sadd.s32 %s240, 1
    %p244 = scmp.eq.s32.totalorder %s17, 1
    %p245 = scmp.ne.s32.totalorder %s240, %s242
    %p246 = scmp.eq.s32.totalorder %s17, 0
    %p247 = por %p245, %p246
    %p248 = scmp.ne.s32.totalorder %s240, %s242
    %p249 = scmp.eq.s32.totalorder %s22, 1
    %p250 = por %p248, %p249
    %p251 = scmp.ne.s32.totalorder %s242, %s243
    %p252 = scmp.eq.s32.totalorder %s22, 0
    %p253 = por %p251, %p252
    %p254 = scmp.ne.s32.totalorder %s242, %s243
    %p255 = scmp.eq.s32.totalorder %s23, 1
    %p256 = por %p254, %p255
    %p258 = scmp.ne.s32.totalorder %s243, %s257
    %p259 = scmp.eq.s32.totalorder %s23, 0
    %p260 = por %p258, %p259
    %s262 = sadd.s32 %s261, 1
    %p265 = scmp.eq.s32.totalorder %s17, 1
    %p266 = scmp.ne.s32.totalorder %s261, %s263
    %p267 = scmp.eq.s32.totalorder %s17, 0
    %p268 = por %p266, %p267
    %p269 = scmp.ne.s32.totalorder %s261, %s263
    %p270 = scmp.eq.s32.totalorder %s22, 1
    %p271 = por %p269, %p270
    %p272 = scmp.ne.s32.totalorder %s263, %s264
    %p273 = scmp.eq.s32.totalorder %s22, 0
    %p274 = por %p272, %p273
    %p275 = scmp.ne.s32.totalorder %s263, %s264
    %p276 = scmp.eq.s32.totalorder %s23, 1
    %p277 = por %p275, %p276
    %p279 = scmp.ne.s32.totalorder %s264, %s278
    %p280 = scmp.eq.s32.totalorder %s23, 0
    %p281 = por %p279, %p280
    %s282 = ssub.s32 %s24, %s36
    %s283 = ssub.s32 %s25, %s32
    %s284 = sor.u32 %s282, %s283
    %p285 = scmp.eq.s32.totalorder %s284, 0
    %s287 = sadd.s32 %s286, 1
    %s288 = scalar_select %p285, %s286, %s287
    %p291 = pneg %p285
    %p292 = scmp.eq.s32.totalorder %s17, 1
    %p293 = por %p291, %p292
    %p294 = scmp.ne.s32.totalorder %s286, %s289
    %p295 = scmp.eq.s32.totalorder %s17, 0
    %p296 = por %p294, %p295
    %p297 = scmp.ne.s32.totalorder %s286, %s289
    %p298 = scmp.eq.s32.totalorder %s22, 1
    %p299 = por %p297, %p298
    %p300 = scmp.ne.s32.totalorder %s289, %s290
    %p301 = scmp.eq.s32.totalorder %s22, 0
    %p302 = por %p300, %p301
    %p303 = scmp.ne.s32.totalorder %s289, %s290
    %p304 = scmp.eq.s32.totalorder %s23, 1
    %p305 = por %p303, %p304
    %p307 = scmp.ne.s32.totalorder %s290, %s306
    %p308 = scmp.eq.s32.totalorder %s23, 0
    %p309 = por %p307, %p308
    %p310 = scmp.le.s32.totalorder 1, %s17
    %p311 = scmp.lt.s32.totalorder %s17, 3
    %p312 = pnand %p310, %p311
    %p313 = pneg %p312
    // Predicated region
    $region9: #{edge_conv_block.1} parent=5 // pred_check
      _
    $region10: #{edge_conv_block.1} parent=5 // pred_check_branch
      %315 = sbr.rel (%p312) target = $region12
    $region11: #{edge_conv_block.1} parent=5 // pred_region
      %s316 = ssub.s32 %s17, 1
      // Predicated region
      $region13: #{edge_conv_block.1} parent=11 // pred_check
        %p317 = pneg %p106
      $region14: #{edge_conv_block.1} parent=11 // pred_check_branch
        %319 = sbr.rel (%p317) target = $region16
      $region15: #{edge_conv_block.1} parent=11 // pred_region
        _
      $region16: #{edge_conv_block.1} parent=11 // pred_fallthru
        _
      // Predicated region
      $region17: #{edge_conv_block.1} parent=11 // pred_check
        %p320 = pneg %p127
      $region18: #{edge_conv_block.1} parent=11 // pred_check_branch
        %322 = sbr.rel (%p320) target = $region20
      $region19: #{edge_conv_block.1} parent=11 // pred_region
        _
      $region20: #{edge_conv_block.1} parent=11 // pred_fallthru
        _
      // Predicated region
      $region21: #{edge_conv_block.1} parent=11 // pred_check
        %p323 = pneg %p148
      $region22: #{edge_conv_block.1} parent=11 // pred_check_branch
        %325 = sbr.rel (%p323) target = $region24
      $region23: #{edge_conv_block.1} parent=11 // pred_region
        _
      $region24: #{edge_conv_block.1} parent=11 // pred_fallthru
        _
      // Predicated region
      $region25: #{edge_conv_block.1} parent=11 // pred_check
        %p326 = pneg %p169
      $region26: #{edge_conv_block.1} parent=11 // pred_check_branch
        %328 = sbr.rel (%p326) target = $region28
      $region27: #{edge_conv_block.1} parent=11 // pred_region
        _
      $region28: #{edge_conv_block.1} parent=11 // pred_fallthru
        _
      // Predicated region
      $region29: #{edge_conv_block.1} parent=11 // pred_check
        %p329 = pneg %p190
      $region30: #{edge_conv_block.1} parent=11 // pred_check_branch
        %331 = sbr.rel (%p329) target = $region32
      $region31: #{edge_conv_block.1} parent=11 // pred_region
        _
      $region32: #{edge_conv_block.1} parent=11 // pred_fallthru
        _
      // Predicated region
      $region33: #{edge_conv_block.1} parent=11 // pred_check
        %p332 = pneg %p211
      $region34: #{edge_conv_block.1} parent=11 // pred_check_branch
        %334 = sbr.rel (%p332) target = $region36
      $region35: #{edge_conv_block.1} parent=11 // pred_region
        _
      $region36: #{edge_conv_block.1} parent=11 // pred_fallthru
        _
      // Predicated region
      $region37: #{edge_conv_block.1} parent=11 // pred_check
        %p335 = pneg %p232
      $region38: #{edge_conv_block.1} parent=11 // pred_check_branch
        %337 = sbr.rel (%p335) target = $region40
      $region39: #{edge_conv_block.1} parent=11 // pred_region
        _
      $region40: #{edge_conv_block.1} parent=11 // pred_fallthru
        _
      // Predicated region
      $region41: #{edge_conv_block.1} parent=11 // pred_check
        %p338 = pneg %p253
      $region42: #{edge_conv_block.1} parent=11 // pred_check_branch
        %340 = sbr.rel (%p338) target = $region44
      $region43: #{edge_conv_block.1} parent=11 // pred_region
        _
      $region44: #{edge_conv_block.1} parent=11 // pred_fallthru
        _
      // Predicated region
      $region45: #{edge_conv_block.1} parent=11 // pred_check
        %p341 = pneg %p274
      $region46: #{edge_conv_block.1} parent=11 // pred_check_branch
        %343 = sbr.rel (%p341) target = $region48
      $region47: #{edge_conv_block.1} parent=11 // pred_region
        _
      $region48: #{edge_conv_block.1} parent=11 // pred_fallthru
        _
    $region12: #{edge_conv_block.1} parent=5 // pred_fallthru
      _
    %p344 = scmp.lt.s32.totalorder %s17, 2
    // Predicated region
    $region49: #{edge_conv_block.1} parent=5 // pred_check
      %p345 = pneg %p344
    $region50: #{edge_conv_block.1} parent=5 // pred_check_branch
      %347 = sbr.rel (%p345) target = $region52
    $region51: #{edge_conv_block.1} parent=5 // pred_region
      // Predicated region
      $region53: #{edge_conv_block.1} parent=51 // pred_check
        %p348 = pneg %p51
      $region54: #{edge_conv_block.1} parent=51 // pred_check_branch
        %350 = sbr.rel (%p348) target = $region56
      $region55: #{edge_conv_block.1} parent=51 // pred_region
        %s351 = smul.u32 2, %s25
        %p352 = scmp.lt.s32.totalorder %s24, 1
        %s353 = scalar_select %p352, %s24, 1
        %p354 = scmp.lt.s32.totalorder %s351, 1
        %s355 = scalar_select %p354, %s351, 1
        %s356 = smul.addr %s353, 2
        %s357 = sadd.s32 %s355, %s356
        %s358 = smul.addr %s357, 4
        %s359 = scalar_lea.vmem %s0, %s358
        %s360 = smul.u32 2, %s25
      $region56: #{edge_conv_block.1} parent=51 // pred_fallthru
        _
      // Predicated region
      $region57: #{edge_conv_block.1} parent=51 // pred_check
        %p361 = pneg %p79
      $region58: #{edge_conv_block.1} parent=51 // pred_check_branch
        %363 = sbr.rel (%p361) target = $region60
      $region59: #{edge_conv_block.1} parent=51 // pred_region
        %s364 = smul.u32 16, %s25
        %p365 = scmp.lt.s32.totalorder %s24, 1
        %s366 = scalar_select %p365, %s24, 1
        %p367 = scmp.lt.s32.totalorder %s364, 15
        %s368 = scalar_select %p367, %s364, 15
        %s369 = smul.addr %s366, 16
        %s370 = sadd.s32 %s368, %s369
        %s371 = smul.addr %s370, 4
        %s372 = scalar_lea.vmem %s1, %s371
        %s373 = smul.u32 16, %s25
      $region60: #{edge_conv_block.1} parent=51 // pred_fallthru
        _
    $region52: #{edge_conv_block.1} parent=5 // pred_fallthru
      _
    %p374 = scmp.le.s32.totalorder 1, %s17
    %p375 = scmp.lt.s32.totalorder %s17, 3
    %p376 = pnand %p374, %p375
    %p377 = pneg %p376
    // Predicated region
    $region61: #{edge_conv_block.1} parent=5 // pred_check
      _
    $region62: #{edge_conv_block.1} parent=5 // pred_check_branch
      %379 = sbr.rel (%p376) target = $region64
    $region63: #{edge_conv_block.1} parent=5 // pred_region
      %s380 = ssub.s32 %s17, 1
      %s381 = smul.u32 2, %s27
      %p382 = scmp.lt.s32.totalorder %s26, 1
      %s383 = scalar_select %p382, %s26, 1
      %p384 = scmp.lt.s32.totalorder %s381, 1
      %s385 = scalar_select %p384, %s381, 1
      %s386 = smul.addr %s383, 2
      %s387 = sadd.s32 %s385, %s386
      %s388 = smul.addr %s387, 4
      %s389 = scalar_lea.vmem %s0, %s388
      %p390 = pneg %p57
      %p391 = pneg %p54
      %s392 = smul.u32 16, %s27
      %p393 = scmp.lt.s32.totalorder %s26, 1
      %s394 = scalar_select %p393, %s26, 1
      %p395 = scmp.lt.s32.totalorder %s392, 15
      %s396 = scalar_select %p395, %s392, 15
      %s397 = smul.addr %s394, 16
      %s398 = sadd.s32 %s396, %s397
      %s399 = smul.addr %s398, 4
      %s400 = scalar_lea.vmem %s1, %s399
      %p401 = pneg %p85
      %p402 = pneg %p82
      %p403 = pneg %p106
      %p404 = pneg %p103
      %p405 = pneg %p127
      %p406 = pneg %p124
      %p407 = pneg %p148
      %p408 = pneg %p145
      %p409 = pneg %p169
      %p410 = pneg %p166
      %p411 = pneg %p190
      %p412 = pneg %p187
      %p413 = pneg %p211
      %p414 = pneg %p208
      %p415 = pneg %p232
      %p416 = pneg %p229
      %p417 = pneg %p253
      %p418 = pneg %p250
      %p419 = pneg %p274
      %p420 = pneg %p271
      %p421 = pneg %p302
      %p422 = pneg %p299
      %p423 = scmp.lt.s32.totalorder %s26, 1
      %s424 = scalar_select %p423, %s26, 1
      %p425 = scmp.lt.s32.totalorder %s27, 0
      %s426 = scalar_select %p425, %s27, 0
      %s427 = smul.addr %s424, 4
      %s428 = sadd.s32 %s426, %s427
      %s429 = smul.addr %s428, 8
      %s430 = scalar_lea.vmem %s11, %s429
      %s431 = smul.u32 2, %s27
      %p432 = scmp.lt.s32.totalorder %s26, 1
      %s433 = scalar_select %p432, %s26, 1
      %p434 = scmp.lt.s32.totalorder %s431, 1
      %s435 = scalar_select %p434, %s431, 1
      %s436 = smul.addr %s433, 2
      %s437 = sadd.s32 %s435, %s436
      %s438 = smul.addr %s437, 4
      %s439 = scalar_lea.vmem %s0, %s438
      %s440 = smul.u32 2, %s27
      %s441 = smul.u32 16, %s27
      %p442 = scmp.lt.s32.totalorder %s26, 1
      %s443 = scalar_select %p442, %s26, 1
      %p444 = scmp.lt.s32.totalorder %s441, 15
      %s445 = scalar_select %p444, %s441, 15
      %s446 = smul.addr %s443, 16
      %s447 = sadd.s32 %s445, %s446
      %s448 = smul.addr %s447, 4
      %s449 = scalar_lea.vmem %s1, %s448
      %s450 = smul.u32 16, %s27
      %p451 = scmp.lt.s32.totalorder %s26, 1
      %s452 = scalar_select %p451, %s26, 1
      %p453 = scmp.lt.s32.totalorder %s27, 0
      %s454 = scalar_select %p453, %s27, 0
      %s455 = smul.addr %s452, 4
      %s456 = sadd.s32 %s454, %s455
      %s457 = smul.addr %s456, 8
      %s458 = scalar_lea.vmem %s11, %s457
      %v460 = vld [vmem:[%s439] sm:$0xf]
      %v461 = vld [vmem:[%s439 + $0x4] sm:$0xf]
      %v462 = vld [vmem:[%s449] sm:$0xf]
      %v463 = vld [vmem:[%s449 + $0x4] sm:$0xf]
      %v464 = vld [vmem:[%s449 + $0x8] sm:$0xf]
      %v465 = vld [vmem:[%s449 + $0xc] sm:$0xf]
      %v466 = vld [vmem:[%s449 + $0x10] sm:$0xf]
      %v467 = vld [vmem:[%s449 + $0x14] sm:$0xf]
      %v468 = vld [vmem:[%s449 + $0x18] sm:$0xf]
      %v469 = vld [vmem:[%s449 + $0x1c] sm:$0xf]
      %v470 = vld [vmem:[%s449 + $0x20] sm:$0xf]
      %v471 = vld [vmem:[%s449 + $0x24] sm:$0xf]
      %v472 = vld [vmem:[%s449 + $0x28] sm:$0xf]
      %v473 = vld [vmem:[%s449 + $0x2c] sm:$0xf]
      %v474 = vld [vmem:[%s449 + $0x30] sm:$0xf]
      %v475 = vld [vmem:[%s449 + $0x34] sm:$0xf]
      %v476 = vld [vmem:[%s449 + $0x38] sm:$0xf]
      %v477 = vld [vmem:[%s449 + $0x3c] sm:$0xf]
      %v478 = vld [vmem:[%s2] sm:$0xf]
      %v479 = vld [vmem:[%s3] sm:$0xf]
      %v480 = vld [vmem:[%s4] sm:$0x1]
      %v497 = vunpack.c.l.b16 %v462
      %v498 = vunpack.c.l.b16 %v463
      %v499 = vunpack.c.l.b16 %v464
      %v500 = vunpack.c.l.b16 %v465
      %v501 = vunpack.c.l.b16 %v466
      %v502 = vunpack.c.l.b16 %v467
      %v503 = vunpack.c.l.b16 %v468
      %v504 = vunpack.c.l.b16 %v469
      %v505 = vunpack.c.l.b16 %v470
      %v506 = vunpack.c.l.b16 %v471
      %v507 = vunpack.c.l.b16 %v472
      %v508 = vunpack.c.l.b16 %v473
      %v509 = vunpack.c.l.b16 %v474
      %v510 = vunpack.c.l.b16 %v475
      %v511 = vunpack.c.l.b16 %v476
      %v512 = vunpack.c.l.b16 %v477
      %v513 = vpack.c.b16 %v498, %v497
      %v514 = vpack.c.b16 %v500, %v499
      %v515 = vpack.c.b16 %v502, %v501
      %v516 = vpack.c.b16 %v504, %v503
      %v517 = vpack.c.b16 %v506, %v505
      %v518 = vpack.c.b16 %v508, %v507
      %v519 = vpack.c.b16 %v510, %v509
      %v520 = vpack.c.b16 %v512, %v511
      %vm521 = vcmask 64512
      %v523 = vsel %vm521, %v513, 0
      %v526 = vsel %vm521, %v514, 0
      %v529 = vsel %vm521, %v515, 0
      %v532 = vsel %vm521, %v516, 0
      %v535 = vsel %vm521, %v517, 0
      %v538 = vsel %vm521, %v518, 0
      %v541 = vsel %vm521, %v519, 0
      %v544 = vsel %vm521, %v520, 0
      %vm546 = vcmask 1043456
      %v548 = vsel %vm546, %v478, 0
      %550 = vmatprep.subr.bf16.mxu0 0
      %551 = vmatpush1.bf16.msra.mxu0 %v548
      %552 = vmatprep.subr.bf16.mxu0 0
      %553 = vmatpush1.bf16.msra.mxu0 0
      %554 = vmatprep.subr.bf16.mxu0 0
      %555 = vmatpush1.bf16.msra.mxu0 0
      %556 = vmatprep.subr.bf16.mxu0 0
      %557 = vmatpush1.bf16.msra.mxu0 0
      %558 = vmatprep.subr.bf16.mxu0 0
      %559 = vmatpush1.bf16.msra.mxu0 0
      %560 = vmatprep.subr.bf16.mxu0 0
      %561 = vmatpush1.bf16.msra.mxu0 0
      %562 = vmatprep.subr.bf16.mxu0 0
      %563 = vmatpush1.bf16.msra.mxu0 0
      %564 = vmatprep.subr.bf16.mxu0 0
      %565 = vmatpush1.bf16.msra.mxu0 0
      %566 = vmatprep.subr.bf16.mxu0 0
      %567 = vmatpush1.bf16.msra.mxu0 0
      %568 = vmatprep.subr.bf16.mxu0 0
      %569 = vmatpush1.bf16.msra.mxu0 0
      %570 = vmatprep.subr.bf16.mxu0 0
      %571 = vmatpush1.bf16.msra.mxu0 0
      %572 = vmatprep.subr.bf16.mxu0 0
      %573 = vmatpush1.bf16.msra.mxu0 0
      %574 = vmatprep.subr.bf16.mxu0 0
      %575 = vmatpush1.bf16.msra.mxu0 0
      %576 = vmatprep.subr.bf16.mxu0 0
      %577 = vmatpush1.bf16.msra.mxu0 0
      %578 = vmatprep.subr.bf16.mxu0 0
      %579 = vmatpush1.bf16.msra.mxu0 0
      %580 = vmatprep.subr.bf16.mxu0 0
      %581 = vmatpush1.bf16.msra.mxu0 0
      %582 = vmatprep.mubr.bf16.mxu0 0
      %583 = vmatmul.mubr.bf16.gmra.mrb[0].mxu0 %v523
      %v584 = vpop.f32.mrb[0].mxu0
      %v585 = vadd.f32 0.0, %v584
      %v586 = vpop.f32.mrb[0].mxu0
      %v587 = vpop.f32.mrb[0].mxu0
      %v588 = vadd.f32 0.0, %v587
      %v589 = vpop.f32.mrb[0].mxu0
      %590 = vmatprep.mubr.bf16.mxu0 0
      %591 = vmatmul.mubr.bf16.gmra.mrb[0].mxu0 %v526
      %v592 = vpop.f32.mrb[0].mxu0
      %v593 = vadd.f32 0.0, %v592
      %v594 = vpop.f32.mrb[0].mxu0
      %v595 = vpop.f32.mrb[0].mxu0
      %v596 = vadd.f32 0.0, %v595
      %v597 = vpop.f32.mrb[0].mxu0
      %598 = vmatprep.mubr.bf16.mxu0 0
      %599 = vmatmul.mubr.bf16.gmra.mrb[0].mxu0 %v529
      %v600 = vpop.f32.mrb[0].mxu0
      %v601 = vadd.f32 0.0, %v600
      %v602 = vpop.f32.mrb[0].mxu0
      %v603 = vpop.f32.mrb[0].mxu0
      %v604 = vadd.f32 0.0, %v603
      %v605 = vpop.f32.mrb[0].mxu0
      %606 = vmatprep.mubr.bf16.mxu0 0
      %607 = vmatmul.mubr.bf16.gmra.mrb[0].mxu0 %v532
      %v608 = vpop.f32.mrb[0].mxu0
      %v609 = vadd.f32 0.0, %v608
      %v610 = vpop.f32.mrb[0].mxu0
      %v611 = vpop.f32.mrb[0].mxu0
      %v612 = vadd.f32 0.0, %v611
      %v613 = vpop.f32.mrb[0].mxu0
      %614 = vmatprep.mubr.bf16.mxu0 0
      %615 = vmatmul.mubr.bf16.gmra.mrb[0].mxu0 %v535
      %v616 = vpop.f32.mrb[0].mxu0
      %v617 = vadd.f32 0.0, %v616
      %v618 = vpop.f32.mrb[0].mxu0
      %v619 = vpop.f32.mrb[0].mxu0
      %v620 = vadd.f32 0.0, %v619
      %v621 = vpop.f32.mrb[0].mxu0
      %622 = vmatprep.mubr.bf16.mxu0 0
      %623 = vmatmul.mubr.bf16.gmra.mrb[0].mxu0 %v538
      %v624 = vpop.f32.mrb[0].mxu0
      %v625 = vadd.f32 0.0, %v624
      %v626 = vpop.f32.mrb[0].mxu0
      %v627 = vpop.f32.mrb[0].mxu0
      %v628 = vadd.f32 0.0, %v627
      %v629 = vpop.f32.mrb[0].mxu0
      %630 = vmatprep.mubr.bf16.mxu0 0
      %631 = vmatmul.mubr.bf16.gmra.mrb[0].mxu0 %v541
      %v632 = vpop.f32.mrb[0].mxu0
      %v633 = vadd.f32 0.0, %v632
      %v634 = vpop.f32.mrb[0].mxu0
      %v635 = vpop.f32.mrb[0].mxu0
      %v636 = vadd.f32 0.0, %v635
      %v637 = vpop.f32.mrb[0].mxu0
      %638 = vmatprep.mubr.bf16.mxu0 0
      %639 = vmatmul.mubr.bf16.gmra.mrb[0].mxu0 %v544
      %v640 = vpop.f32.mrb[0].mxu0
      %v641 = vadd.f32 0.0, %v640
      %v642 = vpop.f32.mrb[0].mxu0
      %v643 = vpop.f32.mrb[0].mxu0
      %v644 = vadd.f32 0.0, %v643
      %v645 = vpop.f32.mrb[0].mxu0
      %646 = vdwg.mxu0
      %v649 = vunpack.c.l.b16 %v460
      %v650 = vunpack.c.l.b16 %v461
      %v651 = vpack.c.b16 %v650, %v649
      %v653 = vsel %vm521, %v651, 0
      %v656 = vsel %vm546, %v479, 0
      %658 = vmatprep.subr.bf16.mxu0 0
      %659 = vmatpush1.bf16.msra.mxu0 %v656
      %660 = vmatprep.subr.bf16.mxu0 0
      %661 = vmatpush1.bf16.msra.mxu0 0
      %662 = vmatprep.subr.bf16.mxu0 0
      %663 = vmatpush1.bf16.msra.mxu0 0
      %664 = vmatprep.subr.bf16.mxu0 0
      %665 = vmatpush1.bf16.msra.mxu0 0
      %666 = vmatprep.subr.bf16.mxu0 0
      %667 = vmatpush1.bf16.msra.mxu0 0
      %668 = vmatprep.subr.bf16.mxu0 0
      %669 = vmatpush1.bf16.msra.mxu0 0
      %670 = vmatprep.subr.bf16.mxu0 0
      %671 = vmatpush1.bf16.msra.mxu0 0
      %672 = vmatprep.subr.bf16.mxu0 0
      %673 = vmatpush1.bf16.msra.mxu0 0
      %674 = vmatprep.subr.bf16.mxu0 0
      %675 = vmatpush1.bf16.msra.mxu0 0
      %676 = vmatprep.subr.bf16.mxu0 0
      %677 = vmatpush1.bf16.msra.mxu0 0
      %678 = vmatprep.subr.bf16.mxu0 0
      %679 = vmatpush1.bf16.msra.mxu0 0
      %680 = vmatprep.subr.bf16.mxu0 0
      %681 = vmatpush1.bf16.msra.mxu0 0
      %682 = vmatprep.subr.bf16.mxu0 0
      %683 = vmatpush1.bf16.msra.mxu0 0
      %684 = vmatprep.subr.bf16.mxu0 0
      %685 = vmatpush1.bf16.msra.mxu0 0
      %686 = vmatprep.subr.bf16.mxu0 0
      %687 = vmatpush1.bf16.msra.mxu0 0
      %688 = vmatprep.subr.bf16.mxu0 0
      %689 = vmatpush1.bf16.msra.mxu0 0
      %690 = vmatprep.mubr.bf16.mxu0 0
      %691 = vmatmul.mubr.bf16.gmra.mrb[0].mxu0 %v653
      %v692 = vpop.f32.mrb[0].mxu0
      %v693 = vadd.f32 0.0, %v692
      %v694 = vpop.f32.mrb[0].mxu0
      %v695 = vpop.f32.mrb[0].mxu0
      %v696 = vadd.f32 0.0, %v695
      %v697 = vpop.f32.mrb[0].mxu0
      %698 = vdwg.mxu0
      %v701 = vcombine.high %v693, %v693
      %v703 = vunpack.c.l.s4 1966171168
      %v704 = vunpack.c.0.s8 %v703
      %v705 = vlaneseq
      %v706 = vshrl.u32 %v705, 7
      %v707 = vsub.s32 %v704, %v706
      %v708 = vrot.slane %v693, %v707
      %v710 = vunpack.c.l.s4 1966171168
      %v711 = vunpack.c.0.s8 %v710
      %v712 = vlaneseq
      %v713 = vshrl.u32 %v712, 7
      %v714 = vsub.s32 %v711, %v713
      %v715 = vrot.slane %v701, %v714
      %v716 = vcombine.high %v708, %v708
      %v717 = vcombine.high %v715, %v715
      %v719 = vunpack.c.l.s4 1966171168
      %v720 = vunpack.c.0.s8 %v719
      %v721 = vlaneseq
      %v722 = vshrl.u32 %v721, 7
      %v723 = vsub.s32 %v720, %v722
      %v724 = vrot.slane %v708, %v723
      %v726 = vunpack.c.l.s4 1966171168
      %v727 = vunpack.c.0.s8 %v726
      %v728 = vlaneseq
      %v729 = vshrl.u32 %v728, 7
      %v730 = vsub.s32 %v727, %v729
      %v731 = vrot.slane %v715, %v730
      %v733 = vunpack.c.l.s4 1966171168
      %v734 = vunpack.c.0.s8 %v733
      %v735 = vlaneseq
      %v736 = vshrl.u32 %v735, 7
      %v737 = vsub.s32 %v734, %v736
      %v738 = vrot.slane %v716, %v737
      %v740 = vunpack.c.l.s4 1966171168
      %v741 = vunpack.c.0.s8 %v740
      %v742 = vlaneseq
      %v743 = vshrl.u32 %v742, 7
      %v744 = vsub.s32 %v741, %v743
      %v745 = vrot.slane %v717, %v744
      %v746 = vcombine.high %v724, %v724
      %v747 = vcombine.high %v731, %v731
      %v748 = vcombine.high %v738, %v738
      %v749 = vcombine.high %v745, %v745
      %v750 = vcombine.high %v696, %v696
      %v752 = vunpack.c.l.s4 1966171168
      %v753 = vunpack.c.0.s8 %v752
      %v754 = vlaneseq
      %v755 = vshrl.u32 %v754, 7
      %v756 = vsub.s32 %v753, %v755
      %v757 = vrot.slane %v696, %v756
      %v759 = vunpack.c.l.s4 1966171168
      %v760 = vunpack.c.0.s8 %v759
      %v761 = vlaneseq
      %v762 = vshrl.u32 %v761, 7
      %v763 = vsub.s32 %v760, %v762
      %v764 = vrot.slane %v750, %v763
      %v765 = vcombine.high %v757, %v757
      %v766 = vcombine.high %v764, %v764
      %v768 = vunpack.c.l.s4 1966171168
      %v769 = vunpack.c.0.s8 %v768
      %v770 = vlaneseq
      %v771 = vshrl.u32 %v770, 7
      %v772 = vsub.s32 %v769, %v771
      %v773 = vrot.slane %v757, %v772
      %v775 = vunpack.c.l.s4 1966171168
      %v776 = vunpack.c.0.s8 %v775
      %v777 = vlaneseq
      %v778 = vshrl.u32 %v777, 7
      %v779 = vsub.s32 %v776, %v778
      %v780 = vrot.slane %v764, %v779
      %v782 = vunpack.c.l.s4 1966171168
      %v783 = vunpack.c.0.s8 %v782
      %v784 = vlaneseq
      %v785 = vshrl.u32 %v784, 7
      %v786 = vsub.s32 %v783, %v785
      %v787 = vrot.slane %v765, %v786
      %v789 = vunpack.c.l.s4 1966171168
      %v790 = vunpack.c.0.s8 %v789
      %v791 = vlaneseq
      %v792 = vshrl.u32 %v791, 7
      %v793 = vsub.s32 %v790, %v792
      %v794 = vrot.slane %v766, %v793
      %v795 = vcombine.high %v773, %v773
      %v796 = vcombine.high %v780, %v780
      %v797 = vcombine.high %v787, %v787
      %v798 = vcombine.high %v794, %v794
      %v799 = vlaneseq
      %v800 = vshrl.u32 %v799, 7
      %v801 = vsub.s32 0, %v800
      %v802 = vrot.slane %v724, %v801
      %v803 = vlaneseq
      %v804 = vshrl.u32 %v803, 7
      %v805 = vsub.s32 0, %v804
      %v806 = vrot.slane %v738, %v805
      %v807 = vlaneseq
      %v808 = vshrl.u32 %v807, 7
      %v809 = vsub.s32 0, %v808
      %v810 = vrot.slane %v746, %v809
      %v811 = vlaneseq
      %v812 = vshrl.u32 %v811, 7
      %v813 = vsub.s32 0, %v812
      %v814 = vrot.slane %v748, %v813
      %v815 = vlaneseq
      %v816 = vshrl.u32 %v815, 7
      %v817 = vsub.s32 0, %v816
      %v818 = vrot.slane %v731, %v817
      %v819 = vlaneseq
      %v820 = vshrl.u32 %v819, 7
      %v821 = vsub.s32 0, %v820
      %v822 = vrot.slane %v745, %v821
      %v823 = vlaneseq
      %v824 = vshrl.u32 %v823, 7
      %v825 = vsub.s32 0, %v824
      %v826 = vrot.slane %v747, %v825
      %v827 = vlaneseq
      %v828 = vshrl.u32 %v827, 7
      %v829 = vsub.s32 0, %v828
      %v830 = vrot.slane %v749, %v829
      %v831 = vlaneseq
      %v832 = vshrl.u32 %v831, 7
      %v833 = vsub.s32 0, %v832
      %v834 = vrot.slane %v773, %v833
      %v835 = vlaneseq
      %v836 = vshrl.u32 %v835, 7
      %v837 = vsub.s32 0, %v836
      %v838 = vrot.slane %v787, %v837
      %v839 = vlaneseq
      %v840 = vshrl.u32 %v839, 7
      %v841 = vsub.s32 0, %v840
      %v842 = vrot.slane %v795, %v841
      %v843 = vlaneseq
      %v844 = vshrl.u32 %v843, 7
      %v845 = vsub.s32 0, %v844
      %v846 = vrot.slane %v797, %v845
      %v847 = vlaneseq
      %v848 = vshrl.u32 %v847, 7
      %v849 = vsub.s32 0, %v848
      %v850 = vrot.slane %v780, %v849
      %v851 = vlaneseq
      %v852 = vshrl.u32 %v851, 7
      %v853 = vsub.s32 0, %v852
      %v854 = vrot.slane %v794, %v853
      %v855 = vlaneseq
      %v856 = vshrl.u32 %v855, 7
      %v857 = vsub.s32 0, %v856
      %v858 = vrot.slane %v796, %v857
      %v859 = vlaneseq
      %v860 = vshrl.u32 %v859, 7
      %v861 = vsub.s32 0, %v860
      %v862 = vrot.slane %v798, %v861
      %v879 = vadd.f32 %v585, %v802
      %v880 = vadd.f32 %v588, %v806
      %v881 = vadd.f32 %v593, %v810
      %v882 = vadd.f32 %v596, %v814
      %v883 = vadd.f32 %v601, %v818
      %v884 = vadd.f32 %v604, %v822
      %v885 = vadd.f32 %v609, %v826
      %v886 = vadd.f32 %v612, %v830
      %v887 = vadd.f32 %v617, %v834
      %v888 = vadd.f32 %v620, %v838
      %v889 = vadd.f32 %v625, %v842
      %v890 = vadd.f32 %v628, %v846
      %v891 = vadd.f32 %v633, %v850
      %v892 = vadd.f32 %v636, %v854
      %v893 = vadd.f32 %v641, %v858
      %v894 = vadd.f32 %v644, %v862
      %v896 = vlaneseq
      %v897 = vshrl.u32 %v896, 7
      %v898 = vsub.s32 0, %v897
      %v899 = vrot.slane %v480, %v898
      %v901 = vadd.f32 %v879, %v899
      %v902 = vadd.f32 %v880, %v899
      %v903 = vadd.f32 %v881, %v899
      %v904 = vadd.f32 %v882, %v899
      %v905 = vadd.f32 %v883, %v899
      %v906 = vadd.f32 %v884, %v899
      %v907 = vadd.f32 %v885, %v899
      %v908 = vadd.f32 %v886, %v899
      %v909 = vadd.f32 %v887, %v899
      %v910 = vadd.f32 %v888, %v899
      %v911 = vadd.f32 %v889, %v899
      %v912 = vadd.f32 %v890, %v899
      %v913 = vadd.f32 %v891, %v899
      %v914 = vadd.f32 %v892, %v899
      %v915 = vadd.f32 %v893, %v899
      %v916 = vadd.f32 %v894, %v899
      %v917 = vmul.f32 %v901, 1.442695
      %v918 = vpow.pop %v917
      %v919 = vmul.f32 %v902, 1.442695
      %v920 = vpow.pop %v919
      %v921 = vmul.f32 %v903, 1.442695
      %v922 = vpow.pop %v921
      %v923 = vmul.f32 %v904, 1.442695
      %v924 = vpow.pop %v923
      %v925 = vmul.f32 %v905, 1.442695
      %v926 = vpow.pop %v925
      %v927 = vmul.f32 %v906, 1.442695
      %v928 = vpow.pop %v927
      %v929 = vmul.f32 %v907, 1.442695
      %v930 = vpow.pop %v929
      %v931 = vmul.f32 %v908, 1.442695
      %v932 = vpow.pop %v931
      %v933 = vmul.f32 %v909, 1.442695
      %v934 = vpow.pop %v933
      %v935 = vmul.f32 %v910, 1.442695
      %v936 = vpow.pop %v935
      %v937 = vmul.f32 %v911, 1.442695
      %v938 = vpow.pop %v937
      %v939 = vmul.f32 %v912, 1.442695
      %v940 = vpow.pop %v939
      %v941 = vmul.f32 %v913, 1.442695
      %v942 = vpow.pop %v941
      %v943 = vmul.f32 %v914, 1.442695
      %v944 = vpow.pop %v943
      %v945 = vmul.f32 %v915, 1.442695
      %v946 = vpow.pop %v945
      %v947 = vmul.f32 %v916, 1.442695
      %v948 = vpow.pop %v947
      %v949 = vadd.f32 %v918, 1.0
      %v950 = vadd.f32 %v920, 1.0
      %v951 = vadd.f32 %v922, 1.0
      %v952 = vadd.f32 %v924, 1.0
      %v953 = vadd.f32 %v926, 1.0
      %v954 = vadd.f32 %v928, 1.0
      %v955 = vadd.f32 %v930, 1.0
      %v956 = vadd.f32 %v932, 1.0
      %v957 = vadd.f32 %v934, 1.0
      %v958 = vadd.f32 %v936, 1.0
      %v959 = vadd.f32 %v938, 1.0
      %v960 = vadd.f32 %v940, 1.0
      %v961 = vadd.f32 %v942, 1.0
      %v962 = vadd.f32 %v944, 1.0
      %v963 = vadd.f32 %v946, 1.0
      %v964 = vadd.f32 %v948, 1.0
      %v965 = vmul.f32 %v949, %v949
      %v966 = vmul.f32 %v950, %v950
      %v967 = vmul.f32 %v951, %v951
      %v968 = vmul.f32 %v952, %v952
      %v969 = vmul.f32 %v953, %v953
      %v970 = vmul.f32 %v954, %v954
      %v971 = vmul.f32 %v955, %v955
      %v972 = vmul.f32 %v956, %v956
      %v973 = vmul.f32 %v957, %v957
      %v974 = vmul.f32 %v958, %v958
      %v975 = vmul.f32 %v959, %v959
      %v976 = vmul.f32 %v960, %v960
      %v977 = vmul.f32 %v961, %v961
      %v978 = vmul.f32 %v962, %v962
      %v979 = vmul.f32 %v963, %v963
      %v980 = vmul.f32 %v964, %v964
      %v981 = vadd.f32 %v965, 1.0
      %v982 = vadd.f32 %v966, 1.0
      %v983 = vadd.f32 %v967, 1.0
      %v984 = vadd.f32 %v968, 1.0
      %v985 = vadd.f32 %v969, 1.0
      %v986 = vadd.f32 %v970, 1.0
      %v987 = vadd.f32 %v971, 1.0
      %v988 = vadd.f32 %v972, 1.0
      %v989 = vadd.f32 %v973, 1.0
      %v990 = vadd.f32 %v974, 1.0
      %v991 = vadd.f32 %v975, 1.0
      %v992 = vadd.f32 %v976, 1.0
      %v993 = vadd.f32 %v977, 1.0
      %v994 = vadd.f32 %v978, 1.0
      %v995 = vadd.f32 %v979, 1.0
      %v996 = vadd.f32 %v980, 1.0
      %v997 = vrcp.pop %v981
      %v998 = vrcp.pop %v982
      %v999 = vrcp.pop %v983
      %v1000 = vrcp.pop %v984
      %v1001 = vrcp.pop %v985
      %v1002 = vrcp.pop %v986
      %v1003 = vrcp.pop %v987
      %v1004 = vrcp.pop %v988
      %v1005 = vrcp.pop %v989
      %v1006 = vrcp.pop %v990
      %v1007 = vrcp.pop %v991
      %v1008 = vrcp.pop %v992
      %v1009 = vrcp.pop %v993
      %v1010 = vrcp.pop %v994
      %v1011 = vrcp.pop %v995
      %v1012 = vrcp.pop %v996
      %v1013 = vsub.f32 %v965, 1.0
      %v1014 = vsub.f32 %v966, 1.0
      %v1015 = vsub.f32 %v967, 1.0
      %v1016 = vsub.f32 %v968, 1.0
      %v1017 = vsub.f32 %v969, 1.0
      %v1018 = vsub.f32 %v970, 1.0
      %v1019 = vsub.f32 %v971, 1.0
      %v1020 = vsub.f32 %v972, 1.0
      %v1021 = vsub.f32 %v973, 1.0
      %v1022 = vsub.f32 %v974, 1.0
      %v1023 = vsub.f32 %v975, 1.0
      %v1024 = vsub.f32 %v976, 1.0
      %v1025 = vsub.f32 %v977, 1.0
      %v1026 = vsub.f32 %v978, 1.0
      %v1027 = vsub.f32 %v979, 1.0
      %v1028 = vsub.f32 %v980, 1.0
      %v1029 = vmul.f32 %v901, %v1013
      %v1030 = vmul.f32 %v902, %v1014
      %v1031 = vmul.f32 %v903, %v1015
      %v1032 = vmul.f32 %v904, %v1016
      %v1033 = vmul.f32 %v905, %v1017
      %v1034 = vmul.f32 %v906, %v1018
      %v1035 = vmul.f32 %v907, %v1019
      %v1036 = vmul.f32 %v908, %v1020
      %v1037 = vmul.f32 %v909, %v1021
      %v1038 = vmul.f32 %v910, %v1022
      %v1039 = vmul.f32 %v911, %v1023
      %v1040 = vmul.f32 %v912, %v1024
      %v1041 = vmul.f32 %v913, %v1025
      %v1042 = vmul.f32 %v914, %v1026
      %v1043 = vmul.f32 %v915, %v1027
      %v1044 = vmul.f32 %v916, %v1028
      %v1045 = vmul.f32 %v1029, %v997
      %v1046 = vmul.f32 %v1030, %v998
      %v1047 = vmul.f32 %v1031, %v999
      %v1048 = vmul.f32 %v1032, %v1000
      %v1049 = vmul.f32 %v1033, %v1001
      %v1050 = vmul.f32 %v1034, %v1002
      %v1051 = vmul.f32 %v1035, %v1003
      %v1052 = vmul.f32 %v1036, %v1004
      %v1053 = vmul.f32 %v1037, %v1005
      %v1054 = vmul.f32 %v1038, %v1006
      %v1055 = vmul.f32 %v1039, %v1007
      %v1056 = vmul.f32 %v1040, %v1008
      %v1057 = vmul.f32 %v1041, %v1009
      %v1058 = vmul.f32 %v1042, %v1010
      %v1059 = vmul.f32 %v1043, %v1011
      %v1060 = vmul.f32 %v1044, %v1012
      %vm1061 = vcmp.gt.f32.partialorder %v901, 20.0
      %vm1062 = vcmp.gt.f32.partialorder %v902, 20.0
      %vm1063 = vcmp.gt.f32.partialorder %v903, 20.0
      %vm1064 = vcmp.gt.f32.partialorder %v904, 20.0
      %vm1065 = vcmp.gt.f32.partialorder %v905, 20.0
      %vm1066 = vcmp.gt.f32.partialorder %v906, 20.0
      %vm1067 = vcmp.gt.f32.partialorder %v907, 20.0
      %vm1068 = vcmp.gt.f32.partialorder %v908, 20.0
      %vm1069 = vcmp.gt.f32.partialorder %v909, 20.0
      %vm1070 = vcmp.gt.f32.partialorder %v910, 20.0
      %vm1071 = vcmp.gt.f32.partialorder %v911, 20.0
      %vm1072 = vcmp.gt.f32.partialorder %v912, 20.0
      %vm1073 = vcmp.gt.f32.partialorder %v913, 20.0
      %vm1074 = vcmp.gt.f32.partialorder %v914, 20.0
      %vm1075 = vcmp.gt.f32.partialorder %v915, 20.0
      %vm1076 = vcmp.gt.f32.partialorder %v916, 20.0
      %v1077 = vsel %vm1061, %v901, %v1045
      %v1078 = vsel %vm1062, %v902, %v1046
      %v1079 = vsel %vm1063, %v903, %v1047
      %v1080 = vsel %vm1064, %v904, %v1048
      %v1081 = vsel %vm1065, %v905, %v1049
      %v1082 = vsel %vm1066, %v906, %v1050
      %v1083 = vsel %vm1067, %v907, %v1051
      %v1084 = vsel %vm1068, %v908, %v1052
      %v1085 = vsel %vm1069, %v909, %v1053
      %v1086 = vsel %vm1070, %v910, %v1054
      %v1087 = vsel %vm1071, %v911, %v1055
      %v1088 = vsel %vm1072, %v912, %v1056
      %v1089 = vsel %vm1073, %v913, %v1057
      %v1090 = vsel %vm1074, %v914, %v1058
      %v1091 = vsel %vm1075, %v915, %v1059
      %v1092 = vsel %vm1076, %v916, %v1060
      %v1093 = vld [vmem:[%s5] sm:$0xf]
      %v1094 = vld [vmem:[%s5 + $0x4] sm:$0xf]
      %v1095 = vld [vmem:[%s6] sm:$0x1]
      %v1096 = vpack.c.bf16 %v1078, %v1077
      %v1097 = vpack.c.bf16 %v1080, %v1079
      %v1098 = vpack.c.bf16 %v1082, %v1081
      %v1099 = vpack.c.bf16 %v1084, %v1083
      %v1100 = vpack.c.bf16 %v1086, %v1085
      %v1101 = vpack.c.bf16 %v1088, %v1087
      %v1102 = vpack.c.bf16 %v1090, %v1089
      %v1103 = vpack.c.bf16 %v1092, %v1091
      %v1105 = vlaneseq
      %v1106 = vshrl.u32 %v1105, 7
      %v1107 = vsub.s32 0, %v1106
      %v1108 = vrot.slane %v1095, %v1107
      %v1112 = vunpack.c.l.b16 %v1093
      %v1113 = vunpack.c.l.b16 %v1094
      %v1114 = vpack.c.b16 %v1113, %v1112
      %vm1116 = vcmask 130048
      %v1118 = vsel %vm1116, %v1096, 0
      %v1121 = vsel %vm1116, %v1097, 0
      %v1124 = vsel %vm1116, %v1098, 0
      %v1127 = vsel %vm1116, %v1099, 0
      %v1130 = vsel %vm1116, %v1100, 0
      %v1133 = vsel %vm1116, %v1101, 0
      %v1136 = vsel %vm1116, %v1102, 0
      %v1139 = vsel %vm1116, %v1103, 0
      %1141 = vmatprep.subr.bf16.mxu0 0
      %1142 = vmatpush1.bf16.msra.mxu0 %v1114
      %1143 = vmatprep.subr.bf16.mxu0 0
      %1144 = vmatpush1.bf16.msra.mxu0 0
      %1145 = vmatprep.subr.bf16.mxu0 0
      %1146 = vmatpush1.bf16.msra.mxu0 0
      %1147 = vmatprep.subr.bf16.mxu0 0
      %1148 = vmatpush1.bf16.msra.mxu0 0
      %1149 = vmatprep.subr.bf16.mxu0 0
      %1150 = vmatpush1.bf16.msra.mxu0 0
      %1151 = vmatprep.subr.bf16.mxu0 0
      %1152 = vmatpush1.bf16.msra.mxu0 0
      %1153 = vmatprep.subr.bf16.mxu0 0
      %1154 = vmatpush1.bf16.msra.mxu0 0
      %1155 = vmatprep.subr.bf16.mxu0 0
      %1156 = vmatpush1.bf16.msra.mxu0 0
      %1157 = vmatprep.subr.bf16.mxu0 0
      %1158 = vmatpush1.bf16.msra.mxu0 0
      %1159 = vmatprep.subr.bf16.mxu0 0
      %1160 = vmatpush1.bf16.msra.mxu0 0
      %1161 = vmatprep.subr.bf16.mxu0 0
      %1162 = vmatpush1.bf16.msra.mxu0 0
      %1163 = vmatprep.subr.bf16.mxu0 0
      %1164 = vmatpush1.bf16.msra.mxu0 0
      %1165 = vmatprep.subr.bf16.mxu0 0
      %1166 = vmatpush1.bf16.msra.mxu0 0
      %1167 = vmatprep.subr.bf16.mxu0 0
      %1168 = vmatpush1.bf16.msra.mxu0 0
      %1169 = vmatprep.subr.bf16.mxu0 0
      %1170 = vmatpush1.bf16.msra.mxu0 0
      %1171 = vmatprep.subr.bf16.mxu0 0
      %1172 = vmatpush1.bf16.msra.mxu0 0
      %1173 = vmatprep.mubr.bf16.mxu0 0
      %1174 = vmatmul.mubr.bf16.gmra.mrb[0].mxu0 %v1118
      %v1175 = vpop.f32.mrb[0].mxu0
      %v1176 = vadd.f32 %v1108, %v1175
      %v1177 = vpop.f32.mrb[0].mxu0
      %v1178 = vpop.f32.mrb[0].mxu0
      %v1179 = vadd.f32 %v1108, %v1178
      %v1180 = vpop.f32.mrb[0].mxu0
      %1181 = vmatprep.mubr.bf16.mxu0 0
      %1182 = vmatmul.mubr.bf16.gmra.mrb[0].mxu0 %v1121
      %v1183 = vpop.f32.mrb[0].mxu0
      %v1184 = vadd.f32 %v1108, %v1183
      %v1185 = vpop.f32.mrb[0].mxu0
      %v1186 = vpop.f32.mrb[0].mxu0
      %v1187 = vadd.f32 %v1108, %v1186
      %v1188 = vpop.f32.mrb[0].mxu0
      %1189 = vmatprep.mubr.bf16.mxu0 0
      %1190 = vmatmul.mubr.bf16.gmra.mrb[0].mxu0 %v1124
      %v1191 = vpop.f32.mrb[0].mxu0
      %v1192 = vadd.f32 %v1108, %v1191
      %v1193 = vpop.f32.mrb[0].mxu0
      %v1194 = vpop.f32.mrb[0].mxu0
      %v1195 = vadd.f32 %v1108, %v1194
      %v1196 = vpop.f32.mrb[0].mxu0
      %1197 = vmatprep.mubr.bf16.mxu0 0
      %1198 = vmatmul.mubr.bf16.gmra.mrb[0].mxu0 %v1127
      %v1199 = vpop.f32.mrb[0].mxu0
      %v1200 = vadd.f32 %v1108, %v1199
      %v1201 = vpop.f32.mrb[0].mxu0
      %v1202 = vpop.f32.mrb[0].mxu0
      %v1203 = vadd.f32 %v1108, %v1202
      %v1204 = vpop.f32.mrb[0].mxu0
      %1205 = vmatprep.mubr.bf16.mxu0 0
      %1206 = vmatmul.mubr.bf16.gmra.mrb[0].mxu0 %v1130
      %v1207 = vpop.f32.mrb[0].mxu0
      %v1208 = vadd.f32 %v1108, %v1207
      %v1209 = vpop.f32.mrb[0].mxu0
      %v1210 = vpop.f32.mrb[0].mxu0
      %v1211 = vadd.f32 %v1108, %v1210
      %v1212 = vpop.f32.mrb[0].mxu0
      %1213 = vmatprep.mubr.bf16.mxu0 0
      %1214 = vmatmul.mubr.bf16.gmra.mrb[0].mxu0 %v1133
      %v1215 = vpop.f32.mrb[0].mxu0
      %v1216 = vadd.f32 %v1108, %v1215
      %v1217 = vpop.f32.mrb[0].mxu0
      %v1218 = vpop.f32.mrb[0].mxu0
      %v1219 = vadd.f32 %v1108, %v1218
      %v1220 = vpop.f32.mrb[0].mxu0
      %1221 = vmatprep.mubr.bf16.mxu0 0
      %1222 = vmatmul.mubr.bf16.gmra.mrb[0].mxu0 %v1136
      %v1223 = vpop.f32.mrb[0].mxu0
      %v1224 = vadd.f32 %v1108, %v1223
      %v1225 = vpop.f32.mrb[0].mxu0
      %v1226 = vpop.f32.mrb[0].mxu0
      %v1227 = vadd.f32 %v1108, %v1226
      %v1228 = vpop.f32.mrb[0].mxu0
      %1229 = vmatprep.mubr.bf16.mxu0 0
      %1230 = vmatmul.mubr.bf16.gmra.mrb[0].mxu0 %v1139
      %v1231 = vpop.f32.mrb[0].mxu0
      %v1232 = vadd.f32 %v1108, %v1231
      %v1233 = vpop.f32.mrb[0].mxu0
      %v1234 = vpop.f32.mrb[0].mxu0
      %v1235 = vadd.f32 %v1108, %v1234
      %v1236 = vpop.f32.mrb[0].mxu0
      %1237 = vdwg.mxu0
      %v1238 = vmul.f32 %v1176, 1.442695
      %v1239 = vpow.pop %v1238
      %v1240 = vmul.f32 %v1179, 1.442695
      %v1241 = vpow.pop %v1240
      %v1242 = vmul.f32 %v1184, 1.442695
      %v1243 = vpow.pop %v1242
      %v1244 = vmul.f32 %v1187, 1.442695
      %v1245 = vpow.pop %v1244
      %v1246 = vmul.f32 %v1192, 1.442695
      %v1247 = vpow.pop %v1246
      %v1248 = vmul.f32 %v1195, 1.442695
      %v1249 = vpow.pop %v1248
      %v1250 = vmul.f32 %v1200, 1.442695
      %v1251 = vpow.pop %v1250
      %v1252 = vmul.f32 %v1203, 1.442695
      %v1253 = vpow.pop %v1252
      %v1254 = vmul.f32 %v1208, 1.442695
      %v1255 = vpow.pop %v1254
      %v1256 = vmul.f32 %v1211, 1.442695
      %v1257 = vpow.pop %v1256
      %v1258 = vmul.f32 %v1216, 1.442695
      %v1259 = vpow.pop %v1258
      %v1260 = vmul.f32 %v1219, 1.442695
      %v1261 = vpow.pop %v1260
      %v1262 = vmul.f32 %v1224, 1.442695
      %v1263 = vpow.pop %v1262
      %v1264 = vmul.f32 %v1227, 1.442695
      %v1265 = vpow.pop %v1264
      %v1266 = vmul.f32 %v1232, 1.442695
      %v1267 = vpow.pop %v1266
      %v1268 = vmul.f32 %v1235, 1.442695
      %v1269 = vpow.pop %v1268
      %v1270 = vadd.f32 %v1239, 1.0
      %v1271 = vadd.f32 %v1241, 1.0
      %v1272 = vadd.f32 %v1243, 1.0
      %v1273 = vadd.f32 %v1245, 1.0
      %v1274 = vadd.f32 %v1247, 1.0
      %v1275 = vadd.f32 %v1249, 1.0
      %v1276 = vadd.f32 %v1251, 1.0
      %v1277 = vadd.f32 %v1253, 1.0
      %v1278 = vadd.f32 %v1255, 1.0
      %v1279 = vadd.f32 %v1257, 1.0
      %v1280 = vadd.f32 %v1259, 1.0
      %v1281 = vadd.f32 %v1261, 1.0
      %v1282 = vadd.f32 %v1263, 1.0
      %v1283 = vadd.f32 %v1265, 1.0
      %v1284 = vadd.f32 %v1267, 1.0
      %v1285 = vadd.f32 %v1269, 1.0
      %v1286 = vmul.f32 %v1270, %v1270
      %v1287 = vmul.f32 %v1271, %v1271
      %v1288 = vmul.f32 %v1272, %v1272
      %v1289 = vmul.f32 %v1273, %v1273
      %v1290 = vmul.f32 %v1274, %v1274
      %v1291 = vmul.f32 %v1275, %v1275
      %v1292 = vmul.f32 %v1276, %v1276
      %v1293 = vmul.f32 %v1277, %v1277
      %v1294 = vmul.f32 %v1278, %v1278
      %v1295 = vmul.f32 %v1279, %v1279
      %v1296 = vmul.f32 %v1280, %v1280
      %v1297 = vmul.f32 %v1281, %v1281
      %v1298 = vmul.f32 %v1282, %v1282
      %v1299 = vmul.f32 %v1283, %v1283
      %v1300 = vmul.f32 %v1284, %v1284
      %v1301 = vmul.f32 %v1285, %v1285
      %v1302 = vadd.f32 %v1286, 1.0
      %v1303 = vadd.f32 %v1287, 1.0
      %v1304 = vadd.f32 %v1288, 1.0
      %v1305 = vadd.f32 %v1289, 1.0
      %v1306 = vadd.f32 %v1290, 1.0
      %v1307 = vadd.f32 %v1291, 1.0
      %v1308 = vadd.f32 %v1292, 1.0
      %v1309 = vadd.f32 %v1293, 1.0
      %v1310 = vadd.f32 %v1294, 1.0
      %v1311 = vadd.f32 %v1295, 1.0
      %v1312 = vadd.f32 %v1296, 1.0
      %v1313 = vadd.f32 %v1297, 1.0
      %v1314 = vadd.f32 %v1298, 1.0
      %v1315 = vadd.f32 %v1299, 1.0
      %v1316 = vadd.f32 %v1300, 1.0
      %v1317 = vadd.f32 %v1301, 1.0
      %v1318 = vrcp.pop %v1302
      %v1319 = vrcp.pop %v1303
      %v1320 = vrcp.pop %v1304
      %v1321 = vrcp.pop %v1305
      %v1322 = vrcp.pop %v1306
      %v1323 = vrcp.pop %v1307
      %v1324 = vrcp.pop %v1308
      %v1325 = vrcp.pop %v1309
      %v1326 = vrcp.pop %v1310
      %v1327 = vrcp.pop %v1311
      %v1328 = vrcp.pop %v1312
      %v1329 = vrcp.pop %v1313
      %v1330 = vrcp.pop %v1314
      %v1331 = vrcp.pop %v1315
      %v1332 = vrcp.pop %v1316
      %v1333 = vrcp.pop %v1317
      %v1334 = vsub.f32 %v1286, 1.0
      %v1335 = vsub.f32 %v1287, 1.0
      %v1336 = vsub.f32 %v1288, 1.0
      %v1337 = vsub.f32 %v1289, 1.0
      %v1338 = vsub.f32 %v1290, 1.0
      %v1339 = vsub.f32 %v1291, 1.0
      %v1340 = vsub.f32 %v1292, 1.0
      %v1341 = vsub.f32 %v1293, 1.0
      %v1342 = vsub.f32 %v1294, 1.0
      %v1343 = vsub.f32 %v1295, 1.0
      %v1344 = vsub.f32 %v1296, 1.0
      %v1345 = vsub.f32 %v1297, 1.0
      %v1346 = vsub.f32 %v1298, 1.0
      %v1347 = vsub.f32 %v1299, 1.0
      %v1348 = vsub.f32 %v1300, 1.0
      %v1349 = vsub.f32 %v1301, 1.0
      %v1350 = vmul.f32 %v1176, %v1334
      %v1351 = vmul.f32 %v1179, %v1335
      %v1352 = vmul.f32 %v1184, %v1336
      %v1353 = vmul.f32 %v1187, %v1337
      %v1354 = vmul.f32 %v1192, %v1338
      %v1355 = vmul.f32 %v1195, %v1339
      %v1356 = vmul.f32 %v1200, %v1340
      %v1357 = vmul.f32 %v1203, %v1341
      %v1358 = vmul.f32 %v1208, %v1342
      %v1359 = vmul.f32 %v1211, %v1343
      %v1360 = vmul.f32 %v1216, %v1344
      %v1361 = vmul.f32 %v1219, %v1345
      %v1362 = vmul.f32 %v1224, %v1346
      %v1363 = vmul.f32 %v1227, %v1347
      %v1364 = vmul.f32 %v1232, %v1348
      %v1365 = vmul.f32 %v1235, %v1349
      %v1366 = vmul.f32 %v1350, %v1318
      %v1367 = vmul.f32 %v1351, %v1319
      %v1368 = vmul.f32 %v1352, %v1320
      %v1369 = vmul.f32 %v1353, %v1321
      %v1370 = vmul.f32 %v1354, %v1322
      %v1371 = vmul.f32 %v1355, %v1323
      %v1372 = vmul.f32 %v1356, %v1324
      %v1373 = vmul.f32 %v1357, %v1325
      %v1374 = vmul.f32 %v1358, %v1326
      %v1375 = vmul.f32 %v1359, %v1327
      %v1376 = vmul.f32 %v1360, %v1328
      %v1377 = vmul.f32 %v1361, %v1329
      %v1378 = vmul.f32 %v1362, %v1330
      %v1379 = vmul.f32 %v1363, %v1331
      %v1380 = vmul.f32 %v1364, %v1332
      %v1381 = vmul.f32 %v1365, %v1333
      %vm1382 = vcmp.gt.f32.partialorder %v1176, 20.0
      %vm1383 = vcmp.gt.f32.partialorder %v1179, 20.0
      %vm1384 = vcmp.gt.f32.partialorder %v1184, 20.0
      %vm1385 = vcmp.gt.f32.partialorder %v1187, 20.0
      %vm1386 = vcmp.gt.f32.partialorder %v1192, 20.0
      %vm1387 = vcmp.gt.f32.partialorder %v1195, 20.0
      %vm1388 = vcmp.gt.f32.partialorder %v1200, 20.0
      %vm1389 = vcmp.gt.f32.partialorder %v1203, 20.0
      %vm1390 = vcmp.gt.f32.partialorder %v1208, 20.0
      %vm1391 = vcmp.gt.f32.partialorder %v1211, 20.0
      %vm1392 = vcmp.gt.f32.partialorder %v1216, 20.0
      %vm1393 = vcmp.gt.f32.partialorder %v1219, 20.0
      %vm1394 = vcmp.gt.f32.partialorder %v1224, 20.0
      %vm1395 = vcmp.gt.f32.partialorder %v1227, 20.0
      %vm1396 = vcmp.gt.f32.partialorder %v1232, 20.0
      %vm1397 = vcmp.gt.f32.partialorder %v1235, 20.0
      %v1398 = vsel %vm1382, %v1176, %v1366
      %v1399 = vsel %vm1383, %v1179, %v1367
      %v1400 = vsel %vm1384, %v1184, %v1368
      %v1401 = vsel %vm1385, %v1187, %v1369
      %v1402 = vsel %vm1386, %v1192, %v1370
      %v1403 = vsel %vm1387, %v1195, %v1371
      %v1404 = vsel %vm1388, %v1200, %v1372
      %v1405 = vsel %vm1389, %v1203, %v1373
      %v1406 = vsel %vm1390, %v1208, %v1374
      %v1407 = vsel %vm1391, %v1211, %v1375
      %v1408 = vsel %vm1392, %v1216, %v1376
      %v1409 = vsel %vm1393, %v1219, %v1377
      %v1410 = vsel %vm1394, %v1224, %v1378
      %v1411 = vsel %vm1395, %v1227, %v1379
      %v1412 = vsel %vm1396, %v1232, %v1380
      %v1413 = vsel %vm1397, %v1235, %v1381
      %v1414 = vld [vmem:[%s7] sm:$0xf]
      %v1415 = vld [vmem:[%s7 + $0x4] sm:$0xf]
      %v1416 = vld [vmem:[%s8] sm:$0x1]
      %v1417 = vpack.c.bf16 %v1399, %v1398
      %v1418 = vpack.c.bf16 %v1401, %v1400
      %v1419 = vpack.c.bf16 %v1403, %v1402
      %v1420 = vpack.c.bf16 %v1405, %v1404
      %v1421 = vpack.c.bf16 %v1407, %v1406
      %v1422 = vpack.c.bf16 %v1409, %v1408
      %v1423 = vpack.c.bf16 %v1411, %v1410
      %v1424 = vpack.c.bf16 %v1413, %v1412
      %v1426 = vlaneseq
      %v1427 = vshrl.u32 %v1426, 7
      %v1428 = vsub.s32 0, %v1427
      %v1429 = vrot.slane %v1416, %v1428
      %v1433 = vunpack.c.l.b16 %v1414
      %v1434 = vunpack.c.l.b16 %v1415
      %v1435 = vpack.c.b16 %v1434, %v1433
      %v1438 = vsel %vm1116, %v1417, 0
      %v1441 = vsel %vm1116, %v1418, 0
      %v1444 = vsel %vm1116, %v1419, 0
      %v1447 = vsel %vm1116, %v1420, 0
      %v1450 = vsel %vm1116, %v1421, 0
      %v1453 = vsel %vm1116, %v1422, 0
      %v1456 = vsel %vm1116, %v1423, 0
      %v1459 = vsel %vm1116, %v1424, 0
      %1461 = vmatprep.subr.bf16.mxu0 0
      %1462 = vmatpush1.bf16.msra.mxu0 %v1435
      %1463 = vmatprep.subr.bf16.mxu0 0
      %1464 = vmatpush1.bf16.msra.mxu0 0
      %1465 = vmatprep.subr.bf16.mxu0 0
      %1466 = vmatpush1.bf16.msra.mxu0 0
      %1467 = vmatprep.subr.bf16.mxu0 0
      %1468 = vmatpush1.bf16.msra.mxu0 0
      %1469 = vmatprep.subr.bf16.mxu0 0
      %1470 = vmatpush1.bf16.msra.mxu0 0
      %1471 = vmatprep.subr.bf16.mxu0 0
      %1472 = vmatpush1.bf16.msra.mxu0 0
      %1473 = vmatprep.subr.bf16.mxu0 0
      %1474 = vmatpush1.bf16.msra.mxu0 0
      %1475 = vmatprep.subr.bf16.mxu0 0
      %1476 = vmatpush1.bf16.msra.mxu0 0
      %1477 = vmatprep.subr.bf16.mxu0 0
      %1478 = vmatpush1.bf16.msra.mxu0 0
      %1479 = vmatprep.subr.bf16.mxu0 0
      %1480 = vmatpush1.bf16.msra.mxu0 0
      %1481 = vmatprep.subr.bf16.mxu0 0
      %1482 = vmatpush1.bf16.msra.mxu0 0
      %1483 = vmatprep.subr.bf16.mxu0 0
      %1484 = vmatpush1.bf16.msra.mxu0 0
      %1485 = vmatprep.subr.bf16.mxu0 0
      %1486 = vmatpush1.bf16.msra.mxu0 0
      %1487 = vmatprep.subr.bf16.mxu0 0
      %1488 = vmatpush1.bf16.msra.mxu0 0
      %1489 = vmatprep.subr.bf16.mxu0 0
      %1490 = vmatpush1.bf16.msra.mxu0 0
      %1491 = vmatprep.subr.bf16.mxu0 0
      %1492 = vmatpush1.bf16.msra.mxu0 0
      %1493 = vmatprep.mubr.bf16.mxu0 0
      %1494 = vmatmul.mubr.bf16.gmra.mrb[0].mxu0 %v1438
      %v1495 = vpop.f32.mrb[0].mxu0
      %v1496 = vadd.f32 %v1429, %v1495
      %v1497 = vpop.f32.mrb[0].mxu0
      %v1498 = vpop.f32.mrb[0].mxu0
      %v1499 = vadd.f32 %v1429, %v1498
      %v1500 = vpop.f32.mrb[0].mxu0
      %1501 = vmatprep.mubr.bf16.mxu0 0
      %1502 = vmatmul.mubr.bf16.gmra.mrb[0].mxu0 %v1441
      %v1503 = vpop.f32.mrb[0].mxu0
      %v1504 = vadd.f32 %v1429, %v1503
      %v1505 = vpop.f32.mrb[0].mxu0
      %v1506 = vpop.f32.mrb[0].mxu0
      %v1507 = vadd.f32 %v1429, %v1506
      %v1508 = vpop.f32.mrb[0].mxu0
      %1509 = vmatprep.mubr.bf16.mxu0 0
      %1510 = vmatmul.mubr.bf16.gmra.mrb[0].mxu0 %v1444
      %v1511 = vpop.f32.mrb[0].mxu0
      %v1512 = vadd.f32 %v1429, %v1511
      %v1513 = vpop.f32.mrb[0].mxu0
      %v1514 = vpop.f32.mrb[0].mxu0
      %v1515 = vadd.f32 %v1429, %v1514
      %v1516 = vpop.f32.mrb[0].mxu0
      %1517 = vmatprep.mubr.bf16.mxu0 0
      %1518 = vmatmul.mubr.bf16.gmra.mrb[0].mxu0 %v1447
      %v1519 = vpop.f32.mrb[0].mxu0
      %v1520 = vadd.f32 %v1429, %v1519
      %v1521 = vpop.f32.mrb[0].mxu0
      %v1522 = vpop.f32.mrb[0].mxu0
      %v1523 = vadd.f32 %v1429, %v1522
      %v1524 = vpop.f32.mrb[0].mxu0
      %1525 = vmatprep.mubr.bf16.mxu0 0
      %1526 = vmatmul.mubr.bf16.gmra.mrb[0].mxu0 %v1450
      %v1527 = vpop.f32.mrb[0].mxu0
      %v1528 = vadd.f32 %v1429, %v1527
      %v1529 = vpop.f32.mrb[0].mxu0
      %v1530 = vpop.f32.mrb[0].mxu0
      %v1531 = vadd.f32 %v1429, %v1530
      %v1532 = vpop.f32.mrb[0].mxu0
      %1533 = vmatprep.mubr.bf16.mxu0 0
      %1534 = vmatmul.mubr.bf16.gmra.mrb[0].mxu0 %v1453
      %v1535 = vpop.f32.mrb[0].mxu0
      %v1536 = vadd.f32 %v1429, %v1535
      %v1537 = vpop.f32.mrb[0].mxu0
      %v1538 = vpop.f32.mrb[0].mxu0
      %v1539 = vadd.f32 %v1429, %v1538
      %v1540 = vpop.f32.mrb[0].mxu0
      %1541 = vmatprep.mubr.bf16.mxu0 0
      %1542 = vmatmul.mubr.bf16.gmra.mrb[0].mxu0 %v1456
      %v1543 = vpop.f32.mrb[0].mxu0
      %v1544 = vadd.f32 %v1429, %v1543
      %v1545 = vpop.f32.mrb[0].mxu0
      %v1546 = vpop.f32.mrb[0].mxu0
      %v1547 = vadd.f32 %v1429, %v1546
      %v1548 = vpop.f32.mrb[0].mxu0
      %1549 = vmatprep.mubr.bf16.mxu0 0
      %1550 = vmatmul.mubr.bf16.gmra.mrb[0].mxu0 %v1459
      %v1551 = vpop.f32.mrb[0].mxu0
      %v1552 = vadd.f32 %v1429, %v1551
      %v1553 = vpop.f32.mrb[0].mxu0
      %v1554 = vpop.f32.mrb[0].mxu0
      %v1555 = vadd.f32 %v1429, %v1554
      %v1556 = vpop.f32.mrb[0].mxu0
      %1557 = vdwg.mxu0
      %v1558 = vmul.f32 %v1496, 1.442695
      %v1559 = vpow.pop %v1558
      %v1560 = vmul.f32 %v1499, 1.442695
      %v1561 = vpow.pop %v1560
      %v1562 = vmul.f32 %v1504, 1.442695
      %v1563 = vpow.pop %v1562
      %v1564 = vmul.f32 %v1507, 1.442695
      %v1565 = vpow.pop %v1564
      %v1566 = vmul.f32 %v1512, 1.442695
      %v1567 = vpow.pop %v1566
      %v1568 = vmul.f32 %v1515, 1.442695
      %v1569 = vpow.pop %v1568
      %v1570 = vmul.f32 %v1520, 1.442695
      %v1571 = vpow.pop %v1570
      %v1572 = vmul.f32 %v1523, 1.442695
      %v1573 = vpow.pop %v1572
      %v1574 = vmul.f32 %v1528, 1.442695
      %v1575 = vpow.pop %v1574
      %v1576 = vmul.f32 %v1531, 1.442695
      %v1577 = vpow.pop %v1576
      %v1578 = vmul.f32 %v1536, 1.442695
      %v1579 = vpow.pop %v1578
      %v1580 = vmul.f32 %v1539, 1.442695
      %v1581 = vpow.pop %v1580
      %v1582 = vmul.f32 %v1544, 1.442695
      %v1583 = vpow.pop %v1582
      %v1584 = vmul.f32 %v1547, 1.442695
      %v1585 = vpow.pop %v1584
      %v1586 = vmul.f32 %v1552, 1.442695
      %v1587 = vpow.pop %v1586
      %v1588 = vmul.f32 %v1555, 1.442695
      %v1589 = vpow.pop %v1588
      %v1590 = vadd.f32 %v1559, 1.0
      %v1591 = vadd.f32 %v1561, 1.0
      %v1592 = vadd.f32 %v1563, 1.0
      %v1593 = vadd.f32 %v1565, 1.0
      %v1594 = vadd.f32 %v1567, 1.0
      %v1595 = vadd.f32 %v1569, 1.0
      %v1596 = vadd.f32 %v1571, 1.0
      %v1597 = vadd.f32 %v1573, 1.0
      %v1598 = vadd.f32 %v1575, 1.0
      %v1599 = vadd.f32 %v1577, 1.0
      %v1600 = vadd.f32 %v1579, 1.0
      %v1601 = vadd.f32 %v1581, 1.0
      %v1602 = vadd.f32 %v1583, 1.0
      %v1603 = vadd.f32 %v1585, 1.0
      %v1604 = vadd.f32 %v1587, 1.0
      %v1605 = vadd.f32 %v1589, 1.0
      %v1606 = vmul.f32 %v1590, %v1590
      %v1607 = vmul.f32 %v1591, %v1591
      %v1608 = vmul.f32 %v1592, %v1592
      %v1609 = vmul.f32 %v1593, %v1593
      %v1610 = vmul.f32 %v1594, %v1594
      %v1611 = vmul.f32 %v1595, %v1595
      %v1612 = vmul.f32 %v1596, %v1596
      %v1613 = vmul.f32 %v1597, %v1597
      %v1614 = vmul.f32 %v1598, %v1598
      %v1615 = vmul.f32 %v1599, %v1599
      %v1616 = vmul.f32 %v1600, %v1600
      %v1617 = vmul.f32 %v1601, %v1601
      %v1618 = vmul.f32 %v1602, %v1602
      %v1619 = vmul.f32 %v1603, %v1603
      %v1620 = vmul.f32 %v1604, %v1604
      %v1621 = vmul.f32 %v1605, %v1605
      %v1622 = vadd.f32 %v1606, 1.0
      %v1623 = vadd.f32 %v1607, 1.0
      %v1624 = vadd.f32 %v1608, 1.0
      %v1625 = vadd.f32 %v1609, 1.0
      %v1626 = vadd.f32 %v1610, 1.0
      %v1627 = vadd.f32 %v1611, 1.0
      %v1628 = vadd.f32 %v1612, 1.0
      %v1629 = vadd.f32 %v1613, 1.0
      %v1630 = vadd.f32 %v1614, 1.0
      %v1631 = vadd.f32 %v1615, 1.0
      %v1632 = vadd.f32 %v1616, 1.0
      %v1633 = vadd.f32 %v1617, 1.0
      %v1634 = vadd.f32 %v1618, 1.0
      %v1635 = vadd.f32 %v1619, 1.0
      %v1636 = vadd.f32 %v1620, 1.0
      %v1637 = vadd.f32 %v1621, 1.0
      %v1638 = vrcp.pop %v1622
      %v1639 = vrcp.pop %v1623
      %v1640 = vrcp.pop %v1624
      %v1641 = vrcp.pop %v1625
      %v1642 = vrcp.pop %v1626
      %v1643 = vrcp.pop %v1627
      %v1644 = vrcp.pop %v1628
      %v1645 = vrcp.pop %v1629
      %v1646 = vrcp.pop %v1630
      %v1647 = vrcp.pop %v1631
      %v1648 = vrcp.pop %v1632
      %v1649 = vrcp.pop %v1633
      %v1650 = vrcp.pop %v1634
      %v1651 = vrcp.pop %v1635
      %v1652 = vrcp.pop %v1636
      %v1653 = vrcp.pop %v1637
      %v1654 = vsub.f32 %v1606, 1.0
      %v1655 = vsub.f32 %v1607, 1.0
      %v1656 = vsub.f32 %v1608, 1.0
      %v1657 = vsub.f32 %v1609, 1.0
      %v1658 = vsub.f32 %v1610, 1.0
      %v1659 = vsub.f32 %v1611, 1.0
      %v1660 = vsub.f32 %v1612, 1.0
      %v1661 = vsub.f32 %v1613, 1.0
      %v1662 = vsub.f32 %v1614, 1.0
      %v1663 = vsub.f32 %v1615, 1.0
      %v1664 = vsub.f32 %v1616, 1.0
      %v1665 = vsub.f32 %v1617, 1.0
      %v1666 = vsub.f32 %v1618, 1.0
      %v1667 = vsub.f32 %v1619, 1.0
      %v1668 = vsub.f32 %v1620, 1.0
      %v1669 = vsub.f32 %v1621, 1.0
      %v1670 = vmul.f32 %v1496, %v1654
      %v1671 = vmul.f32 %v1499, %v1655
      %v1672 = vmul.f32 %v1504, %v1656
      %v1673 = vmul.f32 %v1507, %v1657
      %v1674 = vmul.f32 %v1512, %v1658
      %v1675 = vmul.f32 %v1515, %v1659
      %v1676 = vmul.f32 %v1520, %v1660
      %v1677 = vmul.f32 %v1523, %v1661
      %v1678 = vmul.f32 %v1528, %v1662
      %v1679 = vmul.f32 %v1531, %v1663
      %v1680 = vmul.f32 %v1536, %v1664
      %v1681 = vmul.f32 %v1539, %v1665
      %v1682 = vmul.f32 %v1544, %v1666
      %v1683 = vmul.f32 %v1547, %v1667
      %v1684 = vmul.f32 %v1552, %v1668
      %v1685 = vmul.f32 %v1555, %v1669
      %v1686 = vmul.f32 %v1670, %v1638
      %v1687 = vmul.f32 %v1671, %v1639
      %v1688 = vmul.f32 %v1672, %v1640
      %v1689 = vmul.f32 %v1673, %v1641
      %v1690 = vmul.f32 %v1674, %v1642
      %v1691 = vmul.f32 %v1675, %v1643
      %v1692 = vmul.f32 %v1676, %v1644
      %v1693 = vmul.f32 %v1677, %v1645
      %v1694 = vmul.f32 %v1678, %v1646
      %v1695 = vmul.f32 %v1679, %v1647
      %v1696 = vmul.f32 %v1680, %v1648
      %v1697 = vmul.f32 %v1681, %v1649
      %v1698 = vmul.f32 %v1682, %v1650
      %v1699 = vmul.f32 %v1683, %v1651
      %v1700 = vmul.f32 %v1684, %v1652
      %v1701 = vmul.f32 %v1685, %v1653
      %vm1702 = vcmp.gt.f32.partialorder %v1496, 20.0
      %vm1703 = vcmp.gt.f32.partialorder %v1499, 20.0
      %vm1704 = vcmp.gt.f32.partialorder %v1504, 20.0
      %vm1705 = vcmp.gt.f32.partialorder %v1507, 20.0
      %vm1706 = vcmp.gt.f32.partialorder %v1512, 20.0
      %vm1707 = vcmp.gt.f32.partialorder %v1515, 20.0
      %vm1708 = vcmp.gt.f32.partialorder %v1520, 20.0
      %vm1709 = vcmp.gt.f32.partialorder %v1523, 20.0
      %vm1710 = vcmp.gt.f32.partialorder %v1528, 20.0
      %vm1711 = vcmp.gt.f32.partialorder %v1531, 20.0
      %vm1712 = vcmp.gt.f32.partialorder %v1536, 20.0
      %vm1713 = vcmp.gt.f32.partialorder %v1539, 20.0
      %vm1714 = vcmp.gt.f32.partialorder %v1544, 20.0
      %vm1715 = vcmp.gt.f32.partialorder %v1547, 20.0
      %vm1716 = vcmp.gt.f32.partialorder %v1552, 20.0
      %vm1717 = vcmp.gt.f32.partialorder %v1555, 20.0
      %v1718 = vsel %vm1702, %v1496, %v1686
      %v1719 = vsel %vm1703, %v1499, %v1687
      %v1720 = vsel %vm1704, %v1504, %v1688
      %v1721 = vsel %vm1705, %v1507, %v1689
      %v1722 = vsel %vm1706, %v1512, %v1690
      %v1723 = vsel %vm1707, %v1515, %v1691
      %v1724 = vsel %vm1708, %v1520, %v1692
      %v1725 = vsel %vm1709, %v1523, %v1693
      %v1726 = vsel %vm1710, %v1528, %v1694
      %v1727 = vsel %vm1711, %v1531, %v1695
      %v1728 = vsel %vm1712, %v1536, %v1696
      %v1729 = vsel %vm1713, %v1539, %v1697
      %v1730 = vsel %vm1714, %v1544, %v1698
      %v1731 = vsel %vm1715, %v1547, %v1699
      %v1732 = vsel %vm1716, %v1552, %v1700
      %v1733 = vsel %vm1717, %v1555, %v1701
      %vm1734 = vcmask 261120
      %v1735 = vsel %vm1734, %v1718, 0.0
      %v1736 = vrot.slane %v1735, 4
      %v1737 = vadd.f32 %v1735, %v1736
      %v1738 = vrot.slane %v1737, 2
      %v1739 = vadd.f32 %v1737, %v1738
      %v1740 = vrot.slane %v1739, 1
      %v1741 = vadd.f32 %v1739, %v1740
      %v1742 = vsel %vm1734, %v1719, 0.0
      %v1743 = vrot.slane %v1742, 4
      %v1744 = vadd.f32 %v1742, %v1743
      %v1745 = vrot.slane %v1744, 2
      %v1746 = vadd.f32 %v1744, %v1745
      %v1747 = vrot.slane %v1746, 1
      %v1748 = vadd.f32 %v1746, %v1747
      %v1749 = vsel %vm1734, %v1720, 0.0
      %v1750 = vrot.slane %v1749, 4
      %v1751 = vadd.f32 %v1749, %v1750
      %v1752 = vrot.slane %v1751, 2
      %v1753 = vadd.f32 %v1751, %v1752
      %v1754 = vrot.slane %v1753, 1
      %v1755 = vadd.f32 %v1753, %v1754
      %v1756 = vsel %vm1734, %v1721, 0.0
      %v1757 = vrot.slane %v1756, 4
      %v1758 = vadd.f32 %v1756, %v1757
      %v1759 = vrot.slane %v1758, 2
      %v1760 = vadd.f32 %v1758, %v1759
      %v1761 = vrot.slane %v1760, 1
      %v1762 = vadd.f32 %v1760, %v1761
      %v1763 = vsel %vm1734, %v1722, 0.0
      %v1764 = vrot.slane %v1763, 4
      %v1765 = vadd.f32 %v1763, %v1764
      %v1766 = vrot.slane %v1765, 2
      %v1767 = vadd.f32 %v1765, %v1766
      %v1768 = vrot.slane %v1767, 1
      %v1769 = vadd.f32 %v1767, %v1768
      %v1770 = vsel %vm1734, %v1723, 0.0
      %v1771 = vrot.slane %v1770, 4
      %v1772 = vadd.f32 %v1770, %v1771
      %v1773 = vrot.slane %v1772, 2
      %v1774 = vadd.f32 %v1772, %v1773
      %v1775 = vrot.slane %v1774, 1
      %v1776 = vadd.f32 %v1774, %v1775
      %v1777 = vsel %vm1734, %v1724, 0.0
      %v1778 = vrot.slane %v1777, 4
      %v1779 = vadd.f32 %v1777, %v1778
      %v1780 = vrot.slane %v1779, 2
      %v1781 = vadd.f32 %v1779, %v1780
      %v1782 = vrot.slane %v1781, 1
      %v1783 = vadd.f32 %v1781, %v1782
      %v1784 = vsel %vm1734, %v1725, 0.0
      %v1785 = vrot.slane %v1784, 4
      %v1786 = vadd.f32 %v1784, %v1785
      %v1787 = vrot.slane %v1786, 2
      %v1788 = vadd.f32 %v1786, %v1787
      %v1789 = vrot.slane %v1788, 1
      %v1790 = vadd.f32 %v1788, %v1789
      %v1791 = vsel %vm1734, %v1726, 0.0
      %v1792 = vrot.slane %v1791, 4
      %v1793 = vadd.f32 %v1791, %v1792
      %v1794 = vrot.slane %v1793, 2
      %v1795 = vadd.f32 %v1793, %v1794
      %v1796 = vrot.slane %v1795, 1
      %v1797 = vadd.f32 %v1795, %v1796
      %v1798 = vsel %vm1734, %v1727, 0.0
      %v1799 = vrot.slane %v1798, 4
      %v1800 = vadd.f32 %v1798, %v1799
      %v1801 = vrot.slane %v1800, 2
      %v1802 = vadd.f32 %v1800, %v1801
      %v1803 = vrot.slane %v1802, 1
      %v1804 = vadd.f32 %v1802, %v1803
      %v1805 = vsel %vm1734, %v1728, 0.0
      %v1806 = vrot.slane %v1805, 4
      %v1807 = vadd.f32 %v1805, %v1806
      %v1808 = vrot.slane %v1807, 2
      %v1809 = vadd.f32 %v1807, %v1808
      %v1810 = vrot.slane %v1809, 1
      %v1811 = vadd.f32 %v1809, %v1810
      %v1812 = vsel %vm1734, %v1729, 0.0
      %v1813 = vrot.slane %v1812, 4
      %v1814 = vadd.f32 %v1812, %v1813
      %v1815 = vrot.slane %v1814, 2
      %v1816 = vadd.f32 %v1814, %v1815
      %v1817 = vrot.slane %v1816, 1
      %v1818 = vadd.f32 %v1816, %v1817
      %v1819 = vsel %vm1734, %v1730, 0.0
      %v1820 = vrot.slane %v1819, 4
      %v1821 = vadd.f32 %v1819, %v1820
      %v1822 = vrot.slane %v1821, 2
      %v1823 = vadd.f32 %v1821, %v1822
      %v1824 = vrot.slane %v1823, 1
      %v1825 = vadd.f32 %v1823, %v1824
      %v1826 = vsel %vm1734, %v1731, 0.0
      %v1827 = vrot.slane %v1826, 4
      %v1828 = vadd.f32 %v1826, %v1827
      %v1829 = vrot.slane %v1828, 2
      %v1830 = vadd.f32 %v1828, %v1829
      %v1831 = vrot.slane %v1830, 1
      %v1832 = vadd.f32 %v1830, %v1831
      %v1833 = vsel %vm1734, %v1732, 0.0
      %v1834 = vrot.slane %v1833, 4
      %v1835 = vadd.f32 %v1833, %v1834
      %v1836 = vrot.slane %v1835, 2
      %v1837 = vadd.f32 %v1835, %v1836
      %v1838 = vrot.slane %v1837, 1
      %v1839 = vadd.f32 %v1837, %v1838
      %v1840 = vsel %vm1734, %v1733, 0.0
      %v1841 = vrot.slane %v1840, 4
      %v1842 = vadd.f32 %v1840, %v1841
      %v1843 = vrot.slane %v1842, 2
      %v1844 = vadd.f32 %v1842, %v1843
      %v1845 = vrot.slane %v1844, 1
      %v1846 = vadd.f32 %v1844, %v1845
      %v1847 = vmul.f32 %v1741, 0.125
      %v1848 = vmul.f32 %v1748, 0.125
      %v1849 = vmul.f32 %v1755, 0.125
      %v1850 = vmul.f32 %v1762, 0.125
      %v1851 = vmul.f32 %v1769, 0.125
      %v1852 = vmul.f32 %v1776, 0.125
      %v1853 = vmul.f32 %v1783, 0.125
      %v1854 = vmul.f32 %v1790, 0.125
      %v1855 = vmul.f32 %v1797, 0.125
      %v1856 = vmul.f32 %v1804, 0.125
      %v1857 = vmul.f32 %v1811, 0.125
      %v1858 = vmul.f32 %v1818, 0.125
      %v1859 = vmul.f32 %v1825, 0.125
      %v1860 = vmul.f32 %v1832, 0.125
      %v1861 = vmul.f32 %v1839, 0.125
      %v1862 = vmul.f32 %v1846, 0.125
      %v1863 = vld [vmem:[%s9] sm:$0xf]
      %v1864 = vld [vmem:[%s10] sm:$0x1]
      %v1866 = vlaneseq
      %v1867 = vshrl.u32 %v1866, 7
      %v1868 = vsub.s32 0, %v1867
      %v1869 = vrot.slane %v1864, %v1868
      %v1872 = vsel %vm546, %v1863, 0
      %1874 = vmatprep.subr.bf16.mxu0 0
      %1875 = vmatpush1.bf16.msra.mxu0 %v1872
      %1876 = vmatprep.subr.bf16.mxu0 0
      %1877 = vmatpush1.bf16.msra.mxu0 0
      %1878 = vmatprep.subr.bf16.mxu0 0
      %1879 = vmatpush1.bf16.msra.mxu0 0
      %1880 = vmatprep.subr.bf16.mxu0 0
      %1881 = vmatpush1.bf16.msra.mxu0 0
      %1882 = vmatprep.subr.bf16.mxu0 0
      %1883 = vmatpush1.bf16.msra.mxu0 0
      %1884 = vmatprep.subr.bf16.mxu0 0
      %1885 = vmatpush1.bf16.msra.mxu0 0
      %1886 = vmatprep.subr.bf16.mxu0 0
      %1887 = vmatpush1.bf16.msra.mxu0 0
      %1888 = vmatprep.subr.bf16.mxu0 0
      %1889 = vmatpush1.bf16.msra.mxu0 0
      %1890 = vmatprep.subr.bf16.mxu0 0
      %1891 = vmatpush1.bf16.msra.mxu0 0
      %1892 = vmatprep.subr.bf16.mxu0 0
      %1893 = vmatpush1.bf16.msra.mxu0 0
      %1894 = vmatprep.subr.bf16.mxu0 0
      %1895 = vmatpush1.bf16.msra.mxu0 0
      %1896 = vmatprep.subr.bf16.mxu0 0
      %1897 = vmatpush1.bf16.msra.mxu0 0
      %1898 = vmatprep.subr.bf16.mxu0 0
      %1899 = vmatpush1.bf16.msra.mxu0 0
      %1900 = vmatprep.subr.bf16.mxu0 0
      %1901 = vmatpush1.bf16.msra.mxu0 0
      %1902 = vmatprep.subr.bf16.mxu0 0
      %1903 = vmatpush1.bf16.msra.mxu0 0
      %1904 = vmatprep.subr.bf16.mxu0 0
      %1905 = vmatpush1.bf16.msra.mxu0 0
      %1906 = vmatprep.mubr.bf16.mxu0 0
      %1907 = vmatmul.mubr.bf16.gmra.mrb[0].mxu0 %v653
      %v1908 = vpop.f32.mrb[0].mxu0
      %v1909 = vadd.f32 %v1869, %v1908
      %v1910 = vpop.f32.mrb[0].mxu0
      %v1911 = vpop.f32.mrb[0].mxu0
      %v1912 = vadd.f32 %v1869, %v1911
      %v1913 = vpop.f32.mrb[0].mxu0
      %1914 = vdwg.mxu0
      %vm1931 = vcmask 1041409
      %v1932 = vsel %vm1931, %v1848, %v1847
      %vm1933 = vcmask 1042434
      %v1934 = vsel %vm1933, %v1849, %v1932
      %vm1935 = vcmask 1043459
      %v1936 = vsel %vm1935, %v1850, %v1934
      %vm1937 = vcmask 1044484
      %v1938 = vsel %vm1937, %v1851, %v1936
      %vm1939 = vcmask 1045509
      %v1940 = vsel %vm1939, %v1852, %v1938
      %vm1941 = vcmask 1046534
      %v1942 = vsel %vm1941, %v1853, %v1940
      %vm1943 = vcmask 1047559
      %v1944 = vsel %vm1943, %v1854, %v1942
      %v1945 = vsel %vm1931, %v1856, %v1855
      %v1946 = vsel %vm1933, %v1857, %v1945
      %v1947 = vsel %vm1935, %v1858, %v1946
      %v1948 = vsel %vm1937, %v1859, %v1947
      %v1949 = vsel %vm1939, %v1860, %v1948
      %v1950 = vsel %vm1941, %v1861, %v1949
      %v1951 = vsel %vm1943, %v1862, %v1950
      %v1954 = vadd.f32 %v1909, %v1944
      %v1955 = vadd.f32 %v1912, %v1951
      %v1956 = vmul.f32 %v1954, 1.442695
      %v1957 = vpow.pop %v1956
      %v1958 = vmul.f32 %v1955, 1.442695
      %v1959 = vpow.pop %v1958
      %v1960 = vadd.f32 %v1957, 1.0
      %v1961 = vadd.f32 %v1959, 1.0
      %v1962 = vmul.f32 %v1960, %v1960
      %v1963 = vmul.f32 %v1961, %v1961
      %v1964 = vadd.f32 %v1962, 1.0
      %v1965 = vadd.f32 %v1963, 1.0
      %v1966 = vrcp.pop %v1964
      %v1967 = vrcp.pop %v1965
      %v1968 = vsub.f32 %v1962, 1.0
      %v1969 = vsub.f32 %v1963, 1.0
      %v1970 = vmul.f32 %v1954, %v1968
      %v1971 = vmul.f32 %v1955, %v1969
      %v1972 = vmul.f32 %v1970, %v1966
      %v1973 = vmul.f32 %v1971, %v1967
      %vm1974 = vcmp.gt.f32.partialorder %v1954, 20.0
      %vm1975 = vcmp.gt.f32.partialorder %v1955, 20.0
      %v1976 = vsel %vm1974, %v1954, %v1972
      %v1977 = vsel %vm1975, %v1955, %v1973
      %1978 = vxpose.xlu0.b32.start [1/16] %v1976, 128
      %1979 = vxpose.xlu0.b32.cont [2/16] %v1977, 128
      %1980 = vxpose.xlu0.b32.cont [3/16] 0.0, 128
      %1981 = vxpose.xlu0.b32.cont [4/16] 0.0, 128
      %1982 = vxpose.xlu0.b32.cont [5/16] 0.0, 128
      %1983 = vxpose.xlu0.b32.cont [6/16] 0.0, 128
      %1984 = vxpose.xlu0.b32.cont [7/16] 0.0, 128
      %1985 = vxpose.xlu0.b32.cont [8/16] 0.0, 128
      %1986 = vxpose.xlu0.b32.cont [9/16] 0.0, 128
      %1987 = vxpose.xlu0.b32.cont [10/16] 0.0, 128
      %1988 = vxpose.xlu0.b32.cont [11/16] 0.0, 128
      %1989 = vxpose.xlu0.b32.cont [12/16] 0.0, 128
      %1990 = vxpose.xlu0.b32.cont [13/16] 0.0, 128
      %1991 = vxpose.xlu0.b32.cont [14/16] 0.0, 128
      %1992 = vxpose.xlu0.b32.cont [15/16] 0.0, 128
      %1993 = vxpose.xlu0.b32.end [16/16] 0.0, 128
      %v1994 = vpop.trf.xlu0
      %v1995 = vpop.trf.xlu0
      %v1996 = vpop.trf.xlu0
      %v1997 = vpop.trf.xlu0
      %v1998 = vpop.trf.xlu0
      %v1999 = vpop.trf.xlu0
      %v2000 = vpop.trf.xlu0
      %v2001 = vpop.trf.xlu0
      %v2002 = vpop.trf.xlu0
      %v2003 = vpop.trf.xlu0
      %v2004 = vpop.trf.xlu0
      %v2005 = vpop.trf.xlu0
      %v2006 = vpop.trf.xlu0
      %v2007 = vpop.trf.xlu0
      %v2008 = vpop.trf.xlu0
      %v2009 = vpop.trf.xlu0
      %2010 = vst.msk [vmem:[%s458] sm:$0xff] %vm1116, %v1994
      %2011 = vst.msk [vmem:[%s458 + $0x8] sm:$0xff] %vm1116, %v1995
      %2012 = vst.msk [vmem:[%s458 + $0x10] sm:$0xff] %vm1116, %v1996
      %2013 = vst.msk [vmem:[%s458 + $0x18] sm:$0xff] %vm1116, %v1997
      %p2014 = scmp.lt.s32.totalorder %s26, 1
      %s2015 = scalar_select %p2014, %s26, 1
      %p2016 = scmp.lt.s32.totalorder %s27, 0
      %s2017 = scalar_select %p2016, %s27, 0
      %s2018 = smul.addr %s2015, 4
      %s2019 = sadd.s32 %s2017, %s2018
      %s2020 = smul.addr %s2019, 8
      %s2021 = scalar_lea.vmem %s11, %s2020
      // Predicated region
      $region65: #{edge_conv_block.1} parent=63 // pred_check
        %p2022 = pneg %p299
      $region66: #{edge_conv_block.1} parent=63 // pred_check_branch
        %2024 = sbr.rel (%p2022) target = $region68
      $region67: #{edge_conv_block.1} parent=63 // pred_region
        _
      $region68: #{edge_conv_block.1} parent=63 // pred_fallthru
        _
    $region64: #{edge_conv_block.1} parent=5 // pred_fallthru
      _
    %p2025 = scmp.le.s32.totalorder 2, %s17
    // Predicated region
    $region69: #{edge_conv_block.1} parent=5 // pred_check
      %p2026 = pneg %p2025
    $region70: #{edge_conv_block.1} parent=5 // pred_check_branch
      %2028 = sbr.rel (%p2026) target = $region72
    $region71: #{edge_conv_block.1} parent=5 // pred_region
      %s2029 = ssub.s32 %s17, 2
      // Predicated region
      $region73: #{edge_conv_block.1} parent=71 // pred_check
        %p2030 = pneg %p305
      $region74: #{edge_conv_block.1} parent=71 // pred_check_branch
        %2032 = sbr.rel (%p2030) target = $region76
      $region75: #{edge_conv_block.1} parent=71 // pred_region
        %p2033 = scmp.lt.s32.totalorder %s28, 1
        %s2034 = scalar_select %p2033, %s28, 1
        %p2035 = scmp.lt.s32.totalorder %s29, 0
        %s2036 = scalar_select %p2035, %s29, 0
        %s2037 = smul.addr %s2034, 4
        %s2038 = sadd.s32 %s2036, %s2037
        %s2039 = smul.addr %s2038, 8
        %s2040 = scalar_lea.vmem %s11, %s2039
      $region76: #{edge_conv_block.1} parent=71 // pred_fallthru
        _
    $region72: #{edge_conv_block.1} parent=5 // pred_fallthru
      _
  $region6: #{edge_conv_block.1} parent=0 // loop_footer
    %s21 = sadd.s32 1, %s17
  $region7: #{edge_conv_block.1} parent=0 // loop_footer_branch
    %16 = sbr.rel target = $region3
  $region8: #{edge_conv_block.1} parent=0 // loop_exit
    _

</llo_original>
